<compile_context>
chip_gen: v5e
topology: v5e:2x2
jax: 0.10.0
libtpu: 0.0.40
codegen_flags: <defaults>
</compile_context>

<pallas_src>
import functools

import jax
import jax.numpy as jnp
from jax import lax
from jax.experimental import pallas as pl
from jax.experimental.pallas import tpu as pltpu

_BN_EPS = 1e-5
_LANE = 128


def _round_up(x, m):
    return (x + m - 1) // m * m


# ----------------------------------------------------------------------------
# Pallas kernel: tap-folded conv (one MXU dot per grid step)
# ----------------------------------------------------------------------------
def _fused_conv_kernel(x_ref, w_ref, b_ref, o_ref, gather_ref, *,
                       offsets, cin, p_lane, b_blk, activation, pre_act):
    """One grid step = `b_blk` images.

    x_ref      : (b_blk, Cin, P_in)        bf16  flattened (pre-padded) pixels
    w_ref      : (Cout, T*Cin)             bf16  tap-folded, BN-scale-folded
    b_ref      : (Cout, 1)                 f32   folded conv-bias + BN shift
    o_ref      : (b_blk, Cout, p_lane)     out dtype, p_lane % 128 == 0
    gather_ref : (T*Cin, b_blk*p_lane)     bf16  VMEM scratch (fused im2col)
    """
    # Gather: each tap is a shifted contiguous window of the resident
    # activation; each slice dies immediately into its scratch store.
    for i in range(b_blk):
        for t, off in enumerate(offsets):
            win = x_ref[i, :, off:off + p_lane]            # (Cin, p_lane)
            if pre_act == "relu":                          # fused `uprelu`
                win = jnp.maximum(win, 0)
            gather_ref[t * cin:(t + 1) * cin,
                       i * p_lane:(i + 1) * p_lane] = win
    # One lane-dense MXU dot with K = T*Cin.
    acc = jnp.dot(w_ref[...], gather_ref[...],
                  preferred_element_type=jnp.float32)      # (Cout, b*p_lane)
    y = acc + b_ref[...]                                   # f32 epilogue
    if activation == "leaky_relu":
        y = jnp.where(y >= 0.0, y, 0.2 * y)
    elif activation == "relu":
        y = jnp.maximum(y, 0.0)
    elif activation == "tanh":
        y = jnp.tanh(y)
    for i in range(b_blk):                                 # 128-aligned slices
        o_ref[i] = y[:, i * p_lane:(i + 1) * p_lane].astype(o_ref.dtype)


def _pick_batch_block(n, cin, p_in, cout, k_dim, p_lane, out_bytes,
                      budget=20 * 1024 * 1024):
    """Images per grid step: as large as VMEM allows, but keep >=2 grid steps
    when the batch allows (so both v7x TensorCores get work)."""
    def block_bytes(b):
        x_blk = b * cin * p_in * 2 * 2                 # bf16, double buffered
        o_blk = b * cout * p_lane * out_bytes * 2
        scratch = k_dim * b * p_lane * 2               # bf16 gather scratch
        w_res = cout * k_dim * 2 + cout * 4            # resident weights+bias
        return x_blk + o_blk + scratch + w_res
    best = 1
    for d in range(1, n + 1):
        if n % d:
            continue
        if block_bytes(d) > budget:
            continue
        if n >= 2 and n // d < 2:
            continue
        best = d
    return best


def _fused_conv_call(x_flat, w_packed, bias, offsets, p_out, *,
                     activation="none", pre_act="none",
                     out_dtype=jnp.bfloat16):
    """x_flat: (N, Cin, P_in); w_packed: (Cout, T*Cin); bias: (Cout,).

    Returns (N, Cout, p_lane) with p_lane = round_up(p_out, 128); only the
    first p_out lanes are valid (tail lanes compute on zero-padded input).
    """
    N, Cin, P_in = x_flat.shape
    Cout, K = w_packed.shape
    offsets = tuple(int(o) for o in offsets)
    T = len(offsets)
    assert K == T * Cin, (K, T, Cin)
    p_lane = _round_up(p_out, _LANE)
    need = p_lane + max(offsets)                       # every read in-bounds
    if P_in < need:
        x_flat = jnp.pad(x_flat, ((0, 0), (0, 0), (0, need - P_in)))
        P_in = need

    out_bytes = jnp.dtype(out_dtype).itemsize
    b_blk = _pick_batch_block(N, Cin, P_in, Cout, K, p_lane, out_bytes)

    x_bf = x_flat.astype(jnp.bfloat16)
    w_bf = w_packed.astype(jnp.bfloat16)
    b2 = bias.astype(jnp.float32).reshape(Cout, 1)

    kernel = functools.partial(
        _fused_conv_kernel, offsets=offsets, cin=Cin, p_lane=p_lane,
        b_blk=b_blk, activation=activation, pre_act=pre_act)

    return pl.pallas_call(
        kernel,
        out_shape=jax.ShapeDtypeStruct((N, Cout, p_lane), out_dtype),
        grid=(N // b_blk,),
        in_specs=[
            pl.BlockSpec((b_blk, Cin, P_in), lambda n: (n, 0, 0)),
            pl.BlockSpec((Cout, K), lambda n: (0, 0)),     # resident weights
            pl.BlockSpec((Cout, 1), lambda n: (0, 0)),     # resident bias
        ],
        out_specs=pl.BlockSpec((b_blk, Cout, p_lane), lambda n: (n, 0, 0)),
        scratch_shapes=[pltpu.VMEM((K, b_blk * p_lane), jnp.bfloat16)],
        compiler_params=pltpu.CompilerParams(
            dimension_semantics=("parallel",),
            vmem_limit_bytes=32 * 1024 * 1024,
        ),
    )(x_bf, w_bf, b2)


# ----------------------------------------------------------------------------
# Init-time weight packing (BN fold + tap fold + deconv phase stacking)
# ----------------------------------------------------------------------------
def _fold_bn(conv_bias, bn, out_ch):
    """Fold conv bias + inference BatchNorm into per-channel (scale, shift)."""
    if bn is not None:
        gamma, beta, mean, var = bn
        s = gamma / jnp.sqrt(var + _BN_EPS)
        b = beta - mean * s
    else:
        s = jnp.ones((out_ch,), jnp.float32)
        b = jnp.zeros((out_ch,), jnp.float32)
    if conv_bias is not None:
        b = b + conv_bias * s
    return s, b


def _pack_conv(w_oihw, conv_bias, bn):
    """Standard Conv2d -> tap-folded (Cout, k*k*Cin) bf16 weights + f32 bias."""
    O, I, k, _ = w_oihw.shape
    scale, shift = _fold_bn(conv_bias, bn, O)
    w = (w_oihw * scale[:, None, None, None]).transpose(0, 2, 3, 1)
    return w.reshape(O, k * k * I).astype(jnp.bfloat16), \
        shift.astype(jnp.float32), k


def _pack_deconv(w_iohw, conv_bias, bn):
    """ConvTranspose2d(k=3,s=2,p=1,op=1) -> 4-phase tap-folded weights.

    Rows are phase-major (ph = ro*2 + so, each block of O output channels);
    columns are sub-pixel-tap-major (t = a*2 + b, each block of I channels).
    """
    I, O, k, _ = w_iohw.shape
    assert k == 3
    scale, shift = _fold_bn(conv_bias, bn, O)
    # equivalent forward kernel: w_eq[o,i,kh,kw] = w[i,o,2-kh,2-kw], BN folded
    w_eq = jnp.transpose(w_iohw[:, :, ::-1, ::-1], (1, 0, 2, 3)) \
        * scale[:, None, None, None]
    w_fold = jnp.zeros((4 * O, 4 * I), jnp.float32)
    for a in range(2):              # input tap (a, b): reads x[:, u+a, v+b]
        for b in range(2):
            t = a * 2 + b
            for ro in range(2):     # output phase (ro, so): out[:, 2u+ro, 2v+so]
                for so in range(2):
                    kh, kw = 2 * a + 1 - ro, 2 * b + 1 - so
                    if 0 <= kh < k and 0 <= kw < k:
                        ph = ro * 2 + so
                        w_fold = w_fold.at[ph * O:(ph + 1) * O,
                                           t * I:(t + 1) * I].set(
                            w_eq[:, :, kh, kw])
    bias_fold = jnp.tile(shift, 4).astype(jnp.float32)
    return w_fold.astype(jnp.bfloat16), bias_fold


# ----------------------------------------------------------------------------
# Conv wrappers (call-time layout prep only; all math is in the Pallas kernel)
# ----------------------------------------------------------------------------
def conv2d_s1(x, w_packed, bias, k, *, pad, pad_mode, activation,
              pre_act="none", out_dtype=jnp.bfloat16):
    """Stride-1 Conv2d (+folded BN) + activation, NCHW in / NCHW out."""
    N, Cin, H, W = x.shape
    if pad > 0:
        x = jnp.pad(x, ((0, 0), (0, 0), (pad, pad), (pad, pad)), mode=pad_mode)
    Hp, Wp = H + 2 * pad, W + 2 * pad
    Ho, Wo = Hp - k + 1, Wp - k + 1
    offsets = tuple(kh * Wp + kw for kh in range(k) for kw in range(k))
    p_out = Ho * Wp                  # row-padded flattened output pixels
    O = w_packed.shape[0]
    y = _fused_conv_call(x.reshape(N, Cin, Hp * Wp), w_packed, bias, offsets,
                         p_out, activation=activation, pre_act=pre_act,
                         out_dtype=out_dtype)
    return y[:, :, :p_out].reshape(N, O, Ho, Wp)[:, :, :, :Wo]


def conv2d_s2_k3(x, w_packed, bias, *, activation, out_dtype=jnp.bfloat16):
    """Conv2d(k=3, stride=2, pad=1) via 2x2 input-phase decomposition."""
    N, Cin, H, W = x.shape
    k = 3
    x = jnp.pad(x, ((0, 0), (0, 0), (1, 1), (1, 1)))
    Hp, Wp = H + 2, W + 2
    Ho, Wo = (Hp - k) // 2 + 1, (Wp - k) // 2 + 1
    He, We = Hp + (Hp % 2), Wp + (Wp % 2)        # even for uniform 2x2 split
    if (He, We) != (Hp, Wp):
        x = jnp.pad(x, ((0, 0), (0, 0), (0, He - Hp), (0, We - Wp)))
    Hh, Wh = He // 2, We // 2
    # phase stack along the pixel axis: index ((r*2+s)*Hh + a)*Wh + b
    xph = x.reshape(N, Cin, Hh, 2, Wh, 2).transpose(0, 1, 3, 5, 2, 4)
    x_flat = xph.reshape(N, Cin, 4 * Hh * Wh)
    offsets = tuple(((kh % 2) * 2 + (kw % 2)) * (Hh * Wh)
                    + (kh // 2) * Wh + (kw // 2)
                    for kh in range(k) for kw in range(k))
    p_out = Ho * Wh
    O = w_packed.shape[0]
    y = _fused_conv_call(x_flat, w_packed, bias, offsets, p_out,
                         activation=activation, out_dtype=out_dtype)
    return y[:, :, :p_out].reshape(N, O, Ho, Wh)[:, :, :, :Wo]


def conv_transpose2d_k3s2(x, w_fold, bias_fold, *, activation,
                          out_dtype=jnp.float32):
    """ConvTranspose2d(k=3,s=2,p=1,op=1) via 4-phase sub-pixel decomposition."""
    N, Cin, H, W = x.shape
    O = w_fold.shape[0] // 4
    # boundary taps read x[u+1] / x[v+1] -> one trailing zero row/col (these
    # map onto the transposed conv's output_padding region, which is zero).
    x = jnp.pad(x, ((0, 0), (0, 0), (0, 1), (0, 1)))
    Hq, Wq = H + 1, W + 1
    offsets = (0, 1, Wq, Wq + 1)                 # tap (a, b) -> a*Wq + b
    p_out = H * Wq
    y = _fused_conv_call(x.reshape(N, Cin, Hq * Wq), w_fold, bias_fold,
                         offsets, p_out, activation=activation,
                         out_dtype=out_dtype)
    # TODO(synk): do this 4-phase interleave with in-kernel strided stores so
    # the skip concat can also be fused into the same output buffer.
    y = y[:, :, :p_out].reshape(N, 2, 2, O, H, Wq)[..., :W]   # (n,ro,so,o,u,v)
    y = jnp.transpose(y, (0, 3, 4, 1, 5, 2))                  # (n,o,u,ro,v,so)
    return y.reshape(N, O, 2 * H, 2 * W)


# ----------------------------------------------------------------------------
# The module
# ----------------------------------------------------------------------------
class PointwiseSubmodule:
    # TODO(synk): the real submodule is an arbitrary user-provided nn.Module
    # (typically a nested UnetSkipConnectionBlock whose skip-concat doubles the
    # channels); this deterministic 1x1-conv stand-in reproduces the z -> 2*z
    # channel contract so the surrounding block's semantics are exact.
    def __init__(self, key, channels):
        k1, k2 = jax.random.split(key)
        self.w = 0.1 * jax.random.normal(k1, (2 * channels, channels, 1, 1),
                                         jnp.float32)
        self.b = 0.1 * jax.random.normal(k2, (2 * channels,), jnp.float32)
        self.w_packed, self.bias, self.k = _pack_conv(self.w, self.b, None)

    def __call__(self, x_nchw):
        return conv2d_s1(x_nchw, self.w_packed, self.bias, self.k, pad=0,
                         pad_mode="constant", activation="none",
                         out_dtype=jnp.bfloat16)


class UnetSkipConnectionBlockPallas:
    """Pallas/TPU equivalent of UnetSkipConnectionBlock.forward (eval-mode BN)."""

    def __init__(self, key, *, out_channels, z_channels, in_channels=None,
                 submodule=None, outermost=False):
        if in_channels is None:
            in_channels = out_channels
        self.outermost = outermost
        self.submodule = submodule
        keys = jax.random.split(key, 12)

        def nrm(k, shape, scale=0.1):
            return scale * jax.random.normal(k, shape, jnp.float32)

        # BatchNorm2d(z_channels): (gamma, beta, running_mean, running_var)
        self.bn_down = (1.0 + nrm(keys[4], (z_channels,)),
                        nrm(keys[5], (z_channels,)),
                        nrm(keys[6], (z_channels,)),
                        1.0 + 0.1 * jax.random.uniform(keys[7], (z_channels,)))
        if outermost:
            # Conv2d(out, z, k=7, p=0, bias=True) after ReflectionPad(3)
            self.w_down = nrm(keys[0], (z_channels, out_channels, 7, 7))
            self.b_down = nrm(keys[1], (z_channels,))
            # Conv2d(2z, out, k=7, p=0, bias=True) after ReflectionPad(3)
            self.w_up = nrm(keys[2], (out_channels, 2 * z_channels, 7, 7))
            self.b_up = nrm(keys[3], (out_channels,))
            self.bn_up = None
            self.down_pack = _pack_conv(self.w_down, self.b_down, self.bn_down)
            self.up_pack = _pack_conv(self.w_up, self.b_up, None)
        else:
            # use_bias = (norm_layer == InstanceNorm2d) -> False for BatchNorm2d
            self.w_down = nrm(keys[0], (z_channels, in_channels, 3, 3))
            self.b_down = None
            # ConvTranspose2d weight layout: (in_ch, out_ch, kh, kw)
            self.w_up = nrm(keys[2], (2 * z_channels, out_channels, 3, 3))
            self.b_up = None
            self.bn_up = (1.0 + nrm(keys[8], (out_channels,)),
                          nrm(keys[9], (out_channels,)),
                          nrm(keys[10], (out_channels,)),
                          1.0 + 0.1 * jax.random.uniform(keys[11],
                                                         (out_channels,)))
            self.down_pack = _pack_conv(self.w_down, self.b_down, self.bn_down)
            self.up_pack = _pack_deconv(self.w_up, self.b_up, self.bn_up)

    def __call__(self, x_nchw):
        if self.outermost:
            wd, bd, kd = self.down_pack
            h = conv2d_s1(x_nchw, wd, bd, kd, pad=3, pad_mode="reflect",
                          activation="leaky_relu", out_dtype=jnp.bfloat16)
            h = self.submodule(h)
            wu, bu, ku = self.up_pack
            # uprelu fused into the up-conv's window gather (pre_act="relu")
            h = conv2d_s1(h, wu, bu, ku, pad=3, pad_mode="reflect",
                          activation="tanh", pre_act="relu",
                          out_dtype=jnp.float32)
            return h
        else:
            wd, bd, _ = self.down_pack
            h = conv2d_s2_k3(x_nchw, wd, bd, activation="leaky_relu",
                             out_dtype=jnp.bfloat16)
            h = self.submodule(h)
            wu, bu = self.up_pack
            h = conv_transpose2d_k3s2(h, wu, bu, activation="relu",
                                      out_dtype=jnp.float32)
            # TODO(synk): fuse this concat by writing the up-conv phases
            # directly into the channel offset of a preallocated (N,2C,H,W)
            # output (needs the in-kernel phase interleave above).
            return jnp.concatenate([x_nchw.astype(jnp.float32), h], axis=1)


# ----------------------------------------------------------------------------
# Pure-JAX reference (lax convs, mirrored bf16 quantization) for correctness
# ----------------------------------------------------------------------------
def _q(x):  # mirror the kernel's bf16 matmul-input precision
    return x.astype(jnp.bfloat16).astype(jnp.float32)


def _act(y, activation):
    if activation == "leaky_relu":
        return jnp.where(y >= 0.0, y, 0.2 * y)
    if activation == "relu":
        return jnp.maximum(y, 0.0)
    if activation == "tanh":
        return jnp.tanh(y)
    return y


def _ref_conv(x, w_oihw, conv_bias, bn, stride, padding, activation):
    s, b = _fold_bn(conv_bias, bn, w_oihw.shape[0])
    w = w_oihw * s[:, None, None, None]
    y = lax.conv_general_dilated(_q(x), _q(w), (stride, stride), padding,
                                 dimension_numbers=("NCHW", "OIHW", "NCHW"),
                                 precision=lax.Precision.HIGHEST)
    return _act(y + b.reshape(1, -1, 1, 1), activation)


def _ref_deconv(x, w_iohw, conv_bias, bn, activation):
    O = w_iohw.shape[1]
    s, b = _fold_bn(conv_bias, bn, O)
    w_eq = jnp.transpose(w_iohw[:, :, ::-1, ::-1], (1, 0, 2, 3)) \
        * s[:, None, None, None]
    y = lax.conv_general_dilated(_q(x), _q(w_eq), (1, 1), ((1, 2), (1, 2)),
                                 lhs_dilation=(2, 2),
                                 dimension_numbers=("NCHW", "OIHW", "NCHW"),
                                 precision=lax.Precision.HIGHEST)
    return _act(y + b.reshape(1, -1, 1, 1), activation)


def reference_forward(block, sub, x):
    if block.outermost:
        xp = jnp.pad(x, ((0, 0), (0, 0), (3, 3), (3, 3)), mode="reflect")
        h = _ref_conv(xp, block.w_down, block.b_down, block.bn_down, 1,
                      ((0, 0), (0, 0)), "leaky_relu")
        h = _ref_conv(h, sub.w, sub.b, None, 1, ((0, 0), (0, 0)), "none")
        h = jnp.maximum(h, 0.0)
        hp = jnp.pad(h, ((0, 0), (0, 0), (3, 3), (3, 3)), mode="reflect")
        return _ref_conv(hp, block.w_up, block.b_up, None, 1,
                         ((0, 0), (0, 0)), "tanh")
    else:
        h = _ref_conv(x, block.w_down, block.b_down, block.bn_down, 2,
                      ((1, 1), (1, 1)), "leaky_relu")
        h = _ref_conv(h, sub.w, sub.b, None, 1, ((0, 0), (0, 0)), "none")
        h = _ref_deconv(h, block.w_up, block.b_up, block.bn_up, "relu")
        return jnp.concatenate([x, h], axis=1)


if __name__ == "__main__":
    key = jax.random.PRNGKey(0)
    k_x, k_blk, k_sub, k_x2, k_blk2, k_sub2 = jax.random.split(key, 6)

    # --- non-outermost block (default path): returns cat([x, model(x)], 1) ---
    N, C, H, W, Z = 2, 8, 16, 16, 16
    x = jax.random.normal(k_x, (N, C, H, W), jnp.float32)
    sub = PointwiseSubmodule(k_sub, Z)
    block = UnetSkipConnectionBlockPallas(k_blk, out_channels=C, z_channels=Z,
                                          submodule=sub, outermost=False)
    fwd = jax.jit(block.__call__)
    y = jax.block_until_ready(fwd(x))
    assert y.shape == (N, 2 * C, H, W), y.shape
    y_ref = reference_forward(block, sub, x)
    err = float(jnp.max(jnp.abs(y - y_ref)))
    assert err < 2e-2, f"non-outermost max|err|={err}"

    # --- outermost block: ReflectionPad + 7x7 convs + tanh, no skip concat ---
    x2 = jax.random.normal(k_x2, (N, C, H, W), jnp.float32)
    sub2 = PointwiseSubmodule(k_sub2, Z)
    block2 = UnetSkipConnectionBlockPallas(k_blk2, out_channels=C, z_channels=Z,
                                           submodule=sub2, outermost=True)
    fwd2 = jax.jit(block2.__call__)
    y2 = jax.block_until_ready(fwd2(x2))
    assert y2.shape == (N, C, H, W), y2.shape
    y2_ref = reference_forward(block2, sub2, x2)
    err2 = float(jnp.max(jnp.abs(y2 - y2_ref)))
    assert err2 < 2e-2, f"outermost max|err|={err2}"

    print("KERNEL_OK")
</pallas_src>

<mosaic_0001>
module attributes {stable_mosaic.version = 11 : i64} {
  func.func @_fused_conv_kernel(%arg0: i32, %arg1: memref<1x8x371xbf16, #tpu.memory_space<vmem>>, %arg2: memref<16x72xbf16, #tpu.memory_space<vmem>>, %arg3: memref<16x1xf32, #tpu.memory_space<vmem>>, %arg4: memref<1x16x128xbf16, #tpu.memory_space<vmem>>, %arg5: memref<72x128xbf16, #tpu.memory_space<vmem>>) attributes {dimension_semantics = [#tpu.dimension_semantics<parallel>], iteration_bounds = array<i64: 2>, scalar_prefetch = 0 : i64, scratch_operands = 1 : i64, tpu.core_type = #tpu.core_type<tc>, window_params = [{transform_indices = @transform_0, window_bounds = array<i64: 1, 8, 371>}, {pipeline_mode = #tpu.pipeline_mode<synchronous>, transform_indices = @transform_1, window_bounds = array<i64: 16, 72>}, {pipeline_mode = #tpu.pipeline_mode<synchronous>, transform_indices = @transform_2, window_bounds = array<i64: 16, 1>}, {transform_indices = @transform_3, window_bounds = array<i64: 1, 16, 128>}]} {
    %c0 = arith.constant 0 : index
    %c0_0 = arith.constant 0 : index
    %c0_1 = arith.constant 0 : index
    %0 = vector.load %arg1[%c0, %c0_0, %c0_1] : memref<1x8x371xbf16, #tpu.memory_space<vmem>>, vector<1x8x128xbf16>
    %1 = vector.shape_cast %0 : vector<1x8x128xbf16> to vector<8x128xbf16>
    %c0_2 = arith.constant 0 : index
    %c0_3 = arith.constant 0 : index
    %2 = vector.load %arg5[%c0_2, %c0_3] : memref<72x128xbf16, #tpu.memory_space<vmem>>, vector<8x128xbf16>
    tpu.vector_store %arg5[%c0_2, %c0_3], %1 {strides = array<i32>} : memref<72x128xbf16, #tpu.memory_space<vmem>>, vector<8x128xbf16>,
    %c0_4 = arith.constant 0 : index
    %c0_5 = arith.constant 0 : index
    %c81 = arith.constant 81 : index
    %3 = vector.load %arg1[%c0_4, %c0_5, %c81] : memref<1x8x371xbf16, #tpu.memory_space<vmem>>, vector<1x8x128xbf16>
    %4 = vector.shape_cast %3 : vector<1x8x128xbf16> to vector<8x128xbf16>
    %c8 = arith.constant 8 : index
    %c0_6 = arith.constant 0 : index
    %5 = vector.load %arg5[%c8, %c0_6] : memref<72x128xbf16, #tpu.memory_space<vmem>>, vector<8x128xbf16>
    tpu.vector_store %arg5[%c8, %c0_6], %4 {strides = array<i32>} : memref<72x128xbf16, #tpu.memory_space<vmem>>, vector<8x128xbf16>,
    %c0_7 = arith.constant 0 : index
    %c0_8 = arith.constant 0 : index
    %c1 = arith.constant 1 : index
    %6 = vector.load %arg1[%c0_7, %c0_8, %c1] : memref<1x8x371xbf16, #tpu.memory_space<vmem>>, vector<1x8x128xbf16>
    %7 = vector.shape_cast %6 : vector<1x8x128xbf16> to vector<8x128xbf16>
    %c16 = arith.constant 16 : index
    %c0_9 = arith.constant 0 : index
    %8 = vector.load %arg5[%c16, %c0_9] : memref<72x128xbf16, #tpu.memory_space<vmem>>, vector<8x128xbf16>
    tpu.vector_store %arg5[%c16, %c0_9], %7 {strides = array<i32>} : memref<72x128xbf16, #tpu.memory_space<vmem>>, vector<8x128xbf16>,
    %c0_10 = arith.constant 0 : index
    %c0_11 = arith.constant 0 : index
    %c162 = arith.constant 162 : index
    %9 = vector.load %arg1[%c0_10, %c0_11, %c162] : memref<1x8x371xbf16, #tpu.memory_space<vmem>>, vector<1x8x128xbf16>
    %10 = vector.shape_cast %9 : vector<1x8x128xbf16> to vector<8x128xbf16>
    %c24 = arith.constant 24 : index
    %c0_12 = arith.constant 0 : index
    %11 = vector.load %arg5[%c24, %c0_12] : memref<72x128xbf16, #tpu.memory_space<vmem>>, vector<8x128xbf16>
    tpu.vector_store %arg5[%c24, %c0_12], %10 {strides = array<i32>} : memref<72x128xbf16, #tpu.memory_space<vmem>>, vector<8x128xbf16>,
    %c0_13 = arith.constant 0 : index
    %c0_14 = arith.constant 0 : index
    %c243 = arith.constant 243 : index
    %12 = vector.load %arg1[%c0_13, %c0_14, %c243] : memref<1x8x371xbf16, #tpu.memory_space<vmem>>, vector<1x8x128xbf16>
    %13 = vector.shape_cast %12 : vector<1x8x128xbf16> to vector<8x128xbf16>
    %c32 = arith.constant 32 : index
    %c0_15 = arith.constant 0 : index
    %14 = vector.load %arg5[%c32, %c0_15] : memref<72x128xbf16, #tpu.memory_space<vmem>>, vector<8x128xbf16>
    tpu.vector_store %arg5[%c32, %c0_15], %13 {strides = array<i32>} : memref<72x128xbf16, #tpu.memory_space<vmem>>, vector<8x128xbf16>,
    %c0_16 = arith.constant 0 : index
    %c0_17 = arith.constant 0 : index
    %c163 = arith.constant 163 : index
    %15 = vector.load %arg1[%c0_16, %c0_17, %c163] : memref<1x8x371xbf16, #tpu.memory_space<vmem>>, vector<1x8x128xbf16>
    %16 = vector.shape_cast %15 : vector<1x8x128xbf16> to vector<8x128xbf16>
    %c40 = arith.constant 40 : index
    %c0_18 = arith.constant 0 : index
    %17 = vector.load %arg5[%c40, %c0_18] : memref<72x128xbf16, #tpu.memory_space<vmem>>, vector<8x128xbf16>
    tpu.vector_store %arg5[%c40, %c0_18], %16 {strides = array<i32>} : memref<72x128xbf16, #tpu.memory_space<vmem>>, vector<8x128xbf16>,
    %c0_19 = arith.constant 0 : index
    %c0_20 = arith.constant 0 : index
    %c9 = arith.constant 9 : index
    %18 = vector.load %arg1[%c0_19, %c0_20, %c9] : memref<1x8x371xbf16, #tpu.memory_space<vmem>>, vector<1x8x128xbf16>
    %19 = vector.shape_cast %18 : vector<1x8x128xbf16> to vector<8x128xbf16>
    %c48 = arith.constant 48 : index
    %c0_21 = arith.constant 0 : index
    %20 = vector.load %arg5[%c48, %c0_21] : memref<72x128xbf16, #tpu.memory_space<vmem>>, vector<8x128xbf16>
    tpu.vector_store %arg5[%c48, %c0_21], %19 {strides = array<i32>} : memref<72x128xbf16, #tpu.memory_space<vmem>>, vector<8x128xbf16>,
    %c0_22 = arith.constant 0 : index
    %c0_23 = arith.constant 0 : index
    %c90 = arith.constant 90 : index
    %21 = vector.load %arg1[%c0_22, %c0_23, %c90] : memref<1x8x371xbf16, #tpu.memory_space<vmem>>, vector<1x8x128xbf16>
    %22 = vector.shape_cast %21 : vector<1x8x128xbf16> to vector<8x128xbf16>
    %c56 = arith.constant 56 : index
    %c0_24 = arith.constant 0 : index
    %23 = vector.load %arg5[%c56, %c0_24] : memref<72x128xbf16, #tpu.memory_space<vmem>>, vector<8x128xbf16>
    tpu.vector_store %arg5[%c56, %c0_24], %22 {strides = array<i32>} : memref<72x128xbf16, #tpu.memory_space<vmem>>, vector<8x128xbf16>,
    %c0_25 = arith.constant 0 : index
    %c0_26 = arith.constant 0 : index
    %c10 = arith.constant 10 : index
    %24 = vector.load %arg1[%c0_25, %c0_26, %c10] : memref<1x8x371xbf16, #tpu.memory_space<vmem>>, vector<1x8x128xbf16>
    %25 = vector.shape_cast %24 : vector<1x8x128xbf16> to vector<8x128xbf16>
    %c64 = arith.constant 64 : index
    %c0_27 = arith.constant 0 : index
    %26 = vector.load %arg5[%c64, %c0_27] : memref<72x128xbf16, #tpu.memory_space<vmem>>, vector<8x128xbf16>
    tpu.vector_store %arg5[%c64, %c0_27], %25 {strides = array<i32>} : memref<72x128xbf16, #tpu.memory_space<vmem>>, vector<8x128xbf16>,
    %c0_28 = arith.constant 0 : index
    %c0_29 = arith.constant 0 : index
    %27 = vector.load %arg2[%c0_28, %c0_29] : memref<16x72xbf16, #tpu.memory_space<vmem>>, vector<16x72xbf16>
    %c0_30 = arith.constant 0 : index
    %c0_31 = arith.constant 0 : index
    %28 = vector.load %arg5[%c0_30, %c0_31] : memref<72x128xbf16, #tpu.memory_space<vmem>>, vector<72x128xbf16>
    %cst = arith.constant dense<0.000000e+00> : vector<16x128xf32>
    %29 = tpu.matmul %27, %28, %cst {dimension_numbers = #tpu.dot_dimension_numbers<[1], [0], [0], [1], [0, 0, 1, 1], [], []>} : vector<16x72xbf16>, vector<72x128xbf16>, vector<16x128xf32> -> vector<16x128xf32>
    %c0_32 = arith.constant 0 : index
    %c0_33 = arith.constant 0 : index
    %30 = vector.load %arg3[%c0_32, %c0_33] : memref<16x1xf32, #tpu.memory_space<vmem>>, vector<16x1xf32>
    %31 = vector.broadcast %30 : vector<16x1xf32> to vector<16x128xf32>
    %32 = arith.addf %29, %31 : vector<16x128xf32>
    %cst_34 = arith.constant 0.000000e+00 : f32
    %33 = vector.broadcast %cst_34 : f32 to vector<16x128xf32>
    %34 = arith.cmpf oge, %32, %33 : vector<16x128xf32>
    %cst_35 = arith.constant 2.000000e-01 : f32
    %35 = vector.broadcast %cst_35 : f32 to vector<16x128xf32>
    %36 = arith.mulf %35, %32 : vector<16x128xf32>
    %37 = arith.select %34, %32, %36 : vector<16x128xi1>, vector<16x128xf32>
    %38 = arith.truncf %37 : vector<16x128xf32> to vector<16x128xbf16>
    %c0_36 = arith.constant 0 : index
    %c0_37 = arith.constant 0 : index
    %c0_38 = arith.constant 0 : index
    %39 = vector.load %arg4[%c0_36, %c0_37, %c0_38] : memref<1x16x128xbf16, #tpu.memory_space<vmem>>, vector<1x16x128xbf16>
    %40 = vector.shape_cast %39 : vector<1x16x128xbf16> to vector<16x128xbf16>
    %41 = vector.shape_cast %38 : vector<16x128xbf16> to vector<1x16x128xbf16>
    tpu.vector_store %arg4[%c0_36, %c0_37, %c0_38], %41 {strides = array<i32>} : memref<1x16x128xbf16, #tpu.memory_space<vmem>>, vector<1x16x128xbf16>,
    return
  }
  func.func @transform_0(%arg0: i32) -> (i32, i32, i32) {
    %c0_i32 = arith.constant 0 : i32
    %c0_i32_0 = arith.constant 0 : i32
    %c0_i32_1 = arith.constant 0 : i32
    return %arg0, %c0_i32, %c0_i32_0 : i32, i32, i32
  }
  func.func @transform_1(%arg0: i32) -> (i32, i32) {
    %c0_i32 = arith.constant 0 : i32
    %c0_i32_0 = arith.constant 0 : i32
    %c0_i32_1 = arith.constant 0 : i32
    return %c0_i32, %c0_i32_0 : i32, i32
  }
  func.func @transform_2(%arg0: i32) -> (i32, i32) {
    %c0_i32 = arith.constant 0 : i32
    %c0_i32_0 = arith.constant 0 : i32
    %c0_i32_1 = arith.constant 0 : i32
    return %c0_i32, %c0_i32_0 : i32, i32
  }
  func.func @transform_3(%arg0: i32) -> (i32, i32, i32) {
    %c0_i32 = arith.constant 0 : i32
    %c0_i32_0 = arith.constant 0 : i32
    %c0_i32_1 = arith.constant 0 : i32
    return %arg0, %c0_i32, %c0_i32_0 : i32, i32, i32
  }
}

module attributes {stable_mosaic.version = 11 : i64} {
  func.func @_fused_conv_kernel(%arg0: i32, %arg1: memref<1x16x128xbf16, #tpu.memory_space<vmem>>, %arg2: memref<32x16xbf16, #tpu.memory_space<vmem>>, %arg3: memref<32x1xf32, #tpu.memory_space<vmem>>, %arg4: memref<1x32x128xbf16, #tpu.memory_space<vmem>>, %arg5: memref<16x128xbf16, #tpu.memory_space<vmem>>) attributes {dimension_semantics = [#tpu.dimension_semantics<parallel>], iteration_bounds = array<i64: 2>, scalar_prefetch = 0 : i64, scratch_operands = 1 : i64, tpu.core_type = #tpu.core_type<tc>, window_params = [{transform_indices = @transform_0, window_bounds = array<i64: 1, 16, 128>}, {pipeline_mode = #tpu.pipeline_mode<synchronous>, transform_indices = @transform_1, window_bounds = array<i64: 32, 16>}, {pipeline_mode = #tpu.pipeline_mode<synchronous>, transform_indices = @transform_2, window_bounds = array<i64: 32, 1>}, {transform_indices = @transform_3, window_bounds = array<i64: 1, 32, 128>}]} {
    %c0 = arith.constant 0 : index
    %c0_0 = arith.constant 0 : index
    %c0_1 = arith.constant 0 : index
    %0 = vector.load %arg1[%c0, %c0_0, %c0_1] : memref<1x16x128xbf16, #tpu.memory_space<vmem>>, vector<1x16x128xbf16>
    %1 = vector.shape_cast %0 : vector<1x16x128xbf16> to vector<16x128xbf16>
    %c0_2 = arith.constant 0 : index
    %c0_3 = arith.constant 0 : index
    %2 = vector.load %arg5[%c0_2, %c0_3] : memref<16x128xbf16, #tpu.memory_space<vmem>>, vector<16x128xbf16>
    tpu.vector_store %arg5[%c0_2, %c0_3], %1 {strides = array<i32>} : memref<16x128xbf16, #tpu.memory_space<vmem>>, vector<16x128xbf16>,
    %c0_4 = arith.constant 0 : index
    %c0_5 = arith.constant 0 : index
    %3 = vector.load %arg2[%c0_4, %c0_5] : memref<32x16xbf16, #tpu.memory_space<vmem>>, vector<32x16xbf16>
    %c0_6 = arith.constant 0 : index
    %c0_7 = arith.constant 0 : index
    %4 = vector.load %arg5[%c0_6, %c0_7] : memref<16x128xbf16, #tpu.memory_space<vmem>>, vector<16x128xbf16>
    %cst = arith.constant dense<0.000000e+00> : vector<32x128xf32>
    %5 = tpu.matmul %3, %4, %cst {dimension_numbers = #tpu.dot_dimension_numbers<[1], [0], [0], [1], [0, 0, 1, 1], [], []>} : vector<32x16xbf16>, vector<16x128xbf16>, vector<32x128xf32> -> vector<32x128xf32>
    %c0_8 = arith.constant 0 : index
    %c0_9 = arith.constant 0 : index
    %6 = vector.load %arg3[%c0_8, %c0_9] : memref<32x1xf32, #tpu.memory_space<vmem>>, vector<32x1xf32>
    %7 = vector.broadcast %6 : vector<32x1xf32> to vector<32x128xf32>
    %8 = arith.addf %5, %7 : vector<32x128xf32>
    %9 = arith.truncf %8 : vector<32x128xf32> to vector<32x128xbf16>
    %c0_10 = arith.constant 0 : index
    %c0_11 = arith.constant 0 : index
    %c0_12 = arith.constant 0 : index
    %10 = vector.load %arg4[%c0_10, %c0_11, %c0_12] : memref<1x32x128xbf16, #tpu.memory_space<vmem>>, vector<1x32x128xbf16>
    %11 = vector.shape_cast %10 : vector<1x32x128xbf16> to vector<32x128xbf16>
    %12 = vector.shape_cast %9 : vector<32x128xbf16> to vector<1x32x128xbf16>
    tpu.vector_store %arg4[%c0_10, %c0_11, %c0_12], %12 {strides = array<i32>} : memref<1x32x128xbf16, #tpu.memory_space<vmem>>, vector<1x32x128xbf16>,
    return
  }
  func.func @transform_0(%arg0: i32) -> (i32, i32, i32) {
    %c0_i32 = arith.constant 0 : i32
    %c0_i32_0 = arith.constant 0 : i32
    %c0_i32_1 = arith.constant 0 : i32
    return %arg0, %c0_i32, %c0_i32_0 : i32, i32, i32
  }
  func.func @transform_1(%arg0: i32) -> (i32, i32) {
    %c0_i32 = arith.constant 0 : i32
    %c0_i32_0 = arith.constant 0 : i32
    %c0_i32_1 = arith.constant 0 : i32
    return %c0_i32, %c0_i32_0 : i32, i32
  }
  func.func @transform_2(%arg0: i32) -> (i32, i32) {
    %c0_i32 = arith.constant 0 : i32
    %c0_i32_0 = arith.constant 0 : i32
    %c0_i32_1 = arith.constant 0 : i32
    return %c0_i32, %c0_i32_0 : i32, i32
  }
  func.func @transform_3(%arg0: i32) -> (i32, i32, i32) {
    %c0_i32 = arith.constant 0 : i32
    %c0_i32_0 = arith.constant 0 : i32
    %c0_i32_1 = arith.constant 0 : i32
    return %arg0, %c0_i32, %c0_i32_0 : i32, i32, i32
  }
}

module attributes {stable_mosaic.version = 11 : i64} {
  func.func @_fused_conv_kernel(%arg0: i32, %arg1: memref<1x32x138xbf16, #tpu.memory_space<vmem>>, %arg2: memref<32x128xbf16, #tpu.memory_space<vmem>>, %arg3: memref<32x1xf32, #tpu.memory_space<vmem>>, %arg4: memref<1x32x128xf32, #tpu.memory_space<vmem>>, %arg5: memref<128x128xbf16, #tpu.memory_space<vmem>>) attributes {dimension_semantics = [#tpu.dimension_semantics<parallel>], iteration_bounds = array<i64: 2>, scalar_prefetch = 0 : i64, scratch_operands = 1 : i64, tpu.core_type = #tpu.core_type<tc>, window_params = [{transform_indices = @transform_0, window_bounds = array<i64: 1, 32, 138>}, {pipeline_mode = #tpu.pipeline_mode<synchronous>, transform_indices = @transform_1, window_bounds = array<i64: 32, 128>}, {pipeline_mode = #tpu.pipeline_mode<synchronous>, transform_indices = @transform_2, window_bounds = array<i64: 32, 1>}, {transform_indices = @transform_3, window_bounds = array<i64: 1, 32, 128>}]} {
    %c0 = arith.constant 0 : index
    %c0_0 = arith.constant 0 : index
    %c0_1 = arith.constant 0 : index
    %0 = vector.load %arg1[%c0, %c0_0, %c0_1] : memref<1x32x138xbf16, #tpu.memory_space<vmem>>, vector<1x32x128xbf16>
    %1 = vector.shape_cast %0 : vector<1x32x128xbf16> to vector<32x128xbf16>
    %c0_2 = arith.constant 0 : index
    %c0_3 = arith.constant 0 : index
    %2 = vector.load %arg5[%c0_2, %c0_3] : memref<128x128xbf16, #tpu.memory_space<vmem>>, vector<32x128xbf16>
    tpu.vector_store %arg5[%c0_2, %c0_3], %1 {strides = array<i32>} : memref<128x128xbf16, #tpu.memory_space<vmem>>, vector<32x128xbf16>,
    %c0_4 = arith.constant 0 : index
    %c0_5 = arith.constant 0 : index
    %c1 = arith.constant 1 : index
    %3 = vector.load %arg1[%c0_4, %c0_5, %c1] : memref<1x32x138xbf16, #tpu.memory_space<vmem>>, vector<1x32x128xbf16>
    %4 = vector.shape_cast %3 : vector<1x32x128xbf16> to vector<32x128xbf16>
    %c32 = arith.constant 32 : index
    %c0_6 = arith.constant 0 : index
    %5 = vector.load %arg5[%c32, %c0_6] : memref<128x128xbf16, #tpu.memory_space<vmem>>, vector<32x128xbf16>
    tpu.vector_store %arg5[%c32, %c0_6], %4 {strides = array<i32>} : memref<128x128xbf16, #tpu.memory_space<vmem>>, vector<32x128xbf16>,
    %c0_7 = arith.constant 0 : index
    %c0_8 = arith.constant 0 : index
    %c9 = arith.constant 9 : index
    %6 = vector.load %arg1[%c0_7, %c0_8, %c9] : memref<1x32x138xbf16, #tpu.memory_space<vmem>>, vector<1x32x128xbf16>
    %7 = vector.shape_cast %6 : vector<1x32x128xbf16> to vector<32x128xbf16>
    %c64 = arith.constant 64 : index
    %c0_9 = arith.constant 0 : index
    %8 = vector.load %arg5[%c64, %c0_9] : memref<128x128xbf16, #tpu.memory_space<vmem>>, vector<32x128xbf16>
    tpu.vector_store %arg5[%c64, %c0_9], %7 {strides = array<i32>} : memref<128x128xbf16, #tpu.memory_space<vmem>>, vector<32x128xbf16>,
    %c0_10 = arith.constant 0 : index
    %c0_11 = arith.constant 0 : index
    %c10 = arith.constant 10 : index
    %9 = vector.load %arg1[%c0_10, %c0_11, %c10] : memref<1x32x138xbf16, #tpu.memory_space<vmem>>, vector<1x32x128xbf16>
    %10 = vector.shape_cast %9 : vector<1x32x128xbf16> to vector<32x128xbf16>
    %c96 = arith.constant 96 : index
    %c0_12 = arith.constant 0 : index
    %11 = vector.load %arg5[%c96, %c0_12] : memref<128x128xbf16, #tpu.memory_space<vmem>>, vector<32x128xbf16>
    tpu.vector_store %arg5[%c96, %c0_12], %10 {strides = array<i32>} : memref<128x128xbf16, #tpu.memory_space<vmem>>, vector<32x128xbf16>,
    %c0_13 = arith.constant 0 : index
    %c0_14 = arith.constant 0 : index
    %12 = vector.load %arg2[%c0_13, %c0_14] : memref<32x128xbf16, #tpu.memory_space<vmem>>, vector<32x128xbf16>
    %c0_15 = arith.constant 0 : index
    %c0_16 = arith.constant 0 : index
    %13 = vector.load %arg5[%c0_15, %c0_16] : memref<128x128xbf16, #tpu.memory_space<vmem>>, vector<128x128xbf16>
    %cst = arith.constant dense<0.000000e+00> : vector<32x128xf32>
    %14 = tpu.matmul %12, %13, %cst {dimension_numbers = #tpu.dot_dimension_numbers<[1], [0], [0], [1], [0, 0, 1, 1], [], []>} : vector<32x128xbf16>, vector<128x128xbf16>, vector<32x128xf32> -> vector<32x128xf32>
    %c0_17 = arith.constant 0 : index
    %c0_18 = arith.constant 0 : index
    %15 = vector.load %arg3[%c0_17, %c0_18] : memref<32x1xf32, #tpu.memory_space<vmem>>, vector<32x1xf32>
    %16 = vector.broadcast %15 : vector<32x1xf32> to vector<32x128xf32>
    %17 = arith.addf %14, %16 : vector<32x128xf32>
    %cst_19 = arith.constant 0.000000e+00 : f32
    %18 = vector.broadcast %cst_19 : f32 to vector<32x128xf32>
    %19 = arith.maximumf %17, %18 : vector<32x128xf32>
    %c0_20 = arith.constant 0 : index
    %c0_21 = arith.constant 0 : index
    %c0_22 = arith.constant 0 : index
    %20 = vector.load %arg4[%c0_20, %c0_21, %c0_22] : memref<1x32x128xf32, #tpu.memory_space<vmem>>, vector<1x32x128xf32>
    %21 = vector.shape_cast %20 : vector<1x32x128xf32> to vector<32x128xf32>
    %22 = vector.shape_cast %19 : vector<32x128xf32> to vector<1x32x128xf32>
    tpu.vector_store %arg4[%c0_20, %c0_21, %c0_22], %22 {strides = array<i32>} : memref<1x32x128xf32, #tpu.memory_space<vmem>>, vector<1x32x128xf32>,
    return
  }
  func.func @transform_0(%arg0: i32) -> (i32, i32, i32) {
    %c0_i32 = arith.constant 0 : i32
    %c0_i32_0 = arith.constant 0 : i32
    %c0_i32_1 = arith.constant 0 : i32
    return %arg0, %c0_i32, %c0_i32_0 : i32, i32, i32
  }
  func.func @transform_1(%arg0: i32) -> (i32, i32) {
    %c0_i32 = arith.constant 0 : i32
    %c0_i32_0 = arith.constant 0 : i32
    %c0_i32_1 = arith.constant 0 : i32
    return %c0_i32, %c0_i32_0 : i32, i32
  }
  func.func @transform_2(%arg0: i32) -> (i32, i32) {
    %c0_i32 = arith.constant 0 : i32
    %c0_i32_0 = arith.constant 0 : i32
    %c0_i32_1 = arith.constant 0 : i32
    return %c0_i32, %c0_i32_0 : i32, i32
  }
  func.func @transform_3(%arg0: i32) -> (i32, i32, i32) {
    %c0_i32 = arith.constant 0 : i32
    %c0_i32_0 = arith.constant 0 : i32
    %c0_i32_1 = arith.constant 0 : i32
    return %arg0, %c0_i32, %c0_i32_0 : i32, i32, i32
  }
}

</mosaic_0001>

<llo_original>
// kernel: a_call__.3
$region0: #{a_call__.3}
  #allocation0 [shape = 'u32[]', space=smem, size = 0x4, offset = 0x4, fixed_abs, tag = 'smem constant byte address 0x4 - core index']
  #allocation1 [shape = 'u32[72,128]{1,0:T(1,128)}', space=vmem, size = 0x9000, scoped, tag = 'internal scratch']
  #allocation2 [shape = 'bf16[72,128]{1,0:T(8,128)(2,1)}', space=vmem, size = 0x4800, scoped, tag = 'scratch operand']
  %s0 = inlined_call_operand.vmem [shape: bf16[2,8,371], index: 0, kind: input, shape index: {}]
  %s1 = inlined_call_operand.vmem [shape: bf16[16,72], index: 1, kind: input, shape index: {}]
  %s2 = inlined_call_operand.vmem [shape: f32[16,1], index: 2, kind: input, shape index: {}]
  %s3 = inlined_call_operand.vmem [shape: bf16[2,16,128], index: 3, kind: output, shape index: {}]
  %s4 = sld [smem:[#allocation0]]
  $region45: #{a_call__.3} parent=0
    _
  %s6 = ssub.s32 1, %s4
  %s7 = scalar_select 0, %s6, %s4
  loop: start=0, step=1, limit=4
  $region2: #{a_call__.3} parent=0 // loop_pre_header
    _
  $region3: #{a_call__.3} parent=0 // loop_header
    %s9 = sphi 0, %s13
    %p10 = scmp.ge.s32.totalorder %s9, 4
    %s19 = sphi 0, %s21
    %s22 = sphi 0, %s19
    %s23 = sphi 0, %s22
    %s39 = sphi 0, %s23
    %s43 = sphi 0, %s43
    %s45 = sphi 0, %s43
    %s46 = sphi 0, %s45
    %s60 = sphi 0, %s46
    %s64 = sphi 0, %s64
    %s66 = sphi 0, %s64
    %s67 = sphi 0, %s66
    %s81 = sphi 0, %s67
    %s87 = sphi 0, %s89
    %s90 = sphi 0, %s87
    %s91 = sphi 0, %s90
    %s107 = sphi 0, %s91
  $region4: #{a_call__.3} parent=0 // loop_header_branch
    %12 = sbr.rel (%p10) target = $region8
  $region5: #{a_call__.3} parent=0 // loop_body
    %s14 = ssub.s32 %s9, 1
    %s15 = ssub.s32 %s9, 2
    %s16 = sadd.s32 %s9, 1
    %s17 = ssub.s32 %s9, %s16
    %p18 = scmp.eq.s32.totalorder %s17, 0
    %s20 = sadd.s32 %s19, 1
    %s21 = scalar_select %p18, %s19, %s20
    %p24 = pneg %p18
    %p25 = scmp.eq.s32.totalorder %s9, 1
    %p26 = por %p24, %p25
    %p27 = scmp.ne.s32.totalorder %s19, %s22
    %p28 = scmp.eq.s32.totalorder %s9, 0
    %p29 = por %p27, %p28
    %p30 = scmp.ne.s32.totalorder %s19, %s22
    %p31 = scmp.eq.s32.totalorder %s14, 1
    %p32 = por %p30, %p31
    %p33 = scmp.ne.s32.totalorder %s22, %s23
    %p34 = scmp.eq.s32.totalorder %s14, 0
    %p35 = por %p33, %p34
    %p36 = scmp.ne.s32.totalorder %s22, %s23
    %p37 = scmp.eq.s32.totalorder %s15, 1
    %p38 = por %p36, %p37
    %p40 = scmp.ne.s32.totalorder %s23, %s39
    %p41 = scmp.eq.s32.totalorder %s15, 0
    %p42 = por %p40, %p41
    %s44 = sadd.s32 %s43, 1
    %p47 = scmp.eq.s32.totalorder %s9, 1
    %p48 = scmp.ne.s32.totalorder %s43, %s45
    %p49 = scmp.eq.s32.totalorder %s9, 0
    %p50 = por %p48, %p49
    %p51 = scmp.ne.s32.totalorder %s43, %s45
    %p52 = scmp.eq.s32.totalorder %s14, 1
    %p53 = por %p51, %p52
    %p54 = scmp.ne.s32.totalorder %s45, %s46
    %p55 = scmp.eq.s32.totalorder %s14, 0
    %p56 = por %p54, %p55
    %p57 = scmp.ne.s32.totalorder %s45, %s46
    %p58 = scmp.eq.s32.totalorder %s15, 1
    %p59 = por %p57, %p58
    %p61 = scmp.ne.s32.totalorder %s46, %s60
    %p62 = scmp.eq.s32.totalorder %s15, 0
    %p63 = por %p61, %p62
    %s65 = sadd.s32 %s64, 1
    %p68 = scmp.eq.s32.totalorder %s9, 1
    %p69 = scmp.ne.s32.totalorder %s64, %s66
    %p70 = scmp.eq.s32.totalorder %s9, 0
    %p71 = por %p69, %p70
    %p72 = scmp.ne.s32.totalorder %s64, %s66
    %p73 = scmp.eq.s32.totalorder %s14, 1
    %p74 = por %p72, %p73
    %p75 = scmp.ne.s32.totalorder %s66, %s67
    %p76 = scmp.eq.s32.totalorder %s14, 0
    %p77 = por %p75, %p76
    %p78 = scmp.ne.s32.totalorder %s66, %s67
    %p79 = scmp.eq.s32.totalorder %s15, 1
    %p80 = por %p78, %p79
    %p82 = scmp.ne.s32.totalorder %s67, %s81
    %p83 = scmp.eq.s32.totalorder %s15, 0
    %p84 = por %p82, %p83
    %s85 = ssub.s32 %s9, %s16
    %p86 = scmp.eq.s32.totalorder %s85, 0
    %s88 = sadd.s32 %s87, 1
    %s89 = scalar_select %p86, %s87, %s88
    %p92 = pneg %p86
    %p93 = scmp.eq.s32.totalorder %s9, 1
    %p94 = por %p92, %p93
    %p95 = scmp.ne.s32.totalorder %s87, %s90
    %p96 = scmp.eq.s32.totalorder %s9, 0
    %p97 = por %p95, %p96
    %p98 = scmp.ne.s32.totalorder %s87, %s90
    %p99 = scmp.eq.s32.totalorder %s14, 1
    %p100 = por %p98, %p99
    %p101 = scmp.ne.s32.totalorder %s90, %s91
    %p102 = scmp.eq.s32.totalorder %s14, 0
    %p103 = por %p101, %p102
    %p104 = scmp.ne.s32.totalorder %s90, %s91
    %p105 = scmp.eq.s32.totalorder %s15, 1
    %p106 = por %p104, %p105
    %p108 = scmp.ne.s32.totalorder %s91, %s107
    %p109 = scmp.eq.s32.totalorder %s15, 0
    %p110 = por %p108, %p109
    %p111 = scmp.le.s32.totalorder 1, %s9
    %p112 = scmp.lt.s32.totalorder %s9, 3
    %p113 = pnand %p111, %p112
    %p114 = pneg %p113
    // Predicated region
    $region9: #{a_call__.3} parent=5 // pred_check
      _
    $region10: #{a_call__.3} parent=5 // pred_check_branch
      %116 = sbr.rel (%p113) target = $region12
    $region11: #{a_call__.3} parent=5 // pred_region
      %s117 = ssub.s32 %s9, 1
      // Predicated region
      $region13: #{a_call__.3} parent=11 // pred_check
        %p118 = pneg %p56
      $region14: #{a_call__.3} parent=11 // pred_check_branch
        %120 = sbr.rel (%p118) target = $region16
      $region15: #{a_call__.3} parent=11 // pred_region
        _
      $region16: #{a_call__.3} parent=11 // pred_fallthru
        _
      // Predicated region
      $region17: #{a_call__.3} parent=11 // pred_check
        %p121 = pneg %p77
      $region18: #{a_call__.3} parent=11 // pred_check_branch
        %123 = sbr.rel (%p121) target = $region20
      $region19: #{a_call__.3} parent=11 // pred_region
        _
      $region20: #{a_call__.3} parent=11 // pred_fallthru
        _
    $region12: #{a_call__.3} parent=5 // pred_fallthru
      _
    %p124 = scmp.lt.s32.totalorder %s9, 2
    // Predicated region
    $region21: #{a_call__.3} parent=5 // pred_check
      %p125 = pneg %p124
    $region22: #{a_call__.3} parent=5 // pred_check_branch
      %127 = sbr.rel (%p125) target = $region24
    $region23: #{a_call__.3} parent=5 // pred_region
      // Predicated region
      $region25: #{a_call__.3} parent=23 // pred_check
        %p128 = pneg %p29
      $region26: #{a_call__.3} parent=23 // pred_check_branch
        %130 = sbr.rel (%p128) target = $region28
      $region27: #{a_call__.3} parent=23 // pred_region
        %p131 = scmp.lt.s32.totalorder %s9, 1
        %s132 = scalar_select %p131, %s9, 1
        %s133 = smul.addr %s132, 3
        %s134 = smul.addr %s133, 4
        %s135 = scalar_lea.vmem %s0, %s134
      $region28: #{a_call__.3} parent=23 // pred_fallthru
        _
    $region24: #{a_call__.3} parent=5 // pred_fallthru
      _
    %p136 = scmp.le.s32.totalorder 1, %s9
    %p137 = scmp.lt.s32.totalorder %s9, 3
    %p138 = pnand %p136, %p137
    %p139 = pneg %p138
    // Predicated region
    $region29: #{a_call__.3} parent=5 // pred_check
      _
    $region30: #{a_call__.3} parent=5 // pred_check_branch
      %141 = sbr.rel (%p138) target = $region32
    $region31: #{a_call__.3} parent=5 // pred_region
      %s142 = ssub.s32 %s9, 1
      %p143 = scmp.lt.s32.totalorder %s14, 1
      %s144 = scalar_select %p143, %s14, 1
      %s145 = smul.addr %s144, 3
      %s146 = smul.addr %s145, 4
      %s147 = scalar_lea.vmem %s0, %s146
      %p148 = pneg %p35
      %p149 = pneg %p32
      %p150 = pneg %p56
      %p151 = pneg %p53
      %p152 = pneg %p77
      %p153 = pneg %p74
      %p154 = pneg %p103
      %p155 = pneg %p100
      %p156 = scmp.lt.s32.totalorder %s14, 1
      %s157 = scalar_select %p156, %s14, 1
      %s158 = smul.addr %s157, 2
      %s159 = smul.addr %s158, 4
      %s160 = scalar_lea.vmem %s3, %s159
      %p161 = scmp.lt.s32.totalorder %s14, 1
      %s162 = scalar_select %p161, %s14, 1
      %s163 = smul.addr %s162, 3
      %s164 = smul.addr %s163, 4
      %s165 = scalar_lea.vmem %s0, %s164
      %p166 = scmp.lt.s32.totalorder %s14, 1
      %s167 = scalar_select %p166, %s14, 1
      %s168 = smul.addr %s167, 2
      %s169 = smul.addr %s168, 4
      %s170 = scalar_lea.vmem %s3, %s169
      %v172 = vld [vmem:[%s165] sm:$0xf]
      %173 = vst [vmem:[#allocation2] sm:$0xf] %v172
      %v174 = vld [vmem:[%s165] sm:$0xff]
      %176 = vrot.lane.b32.xlu0 %v174, 47
      %v177 = vpop.permute.xlu0 %176
      %v178 = vrot.slane %v177, 4
      %vm179 = vcmask 384000
      %v180 = vsel %vm179, %v177, %v178
      %182 = vst [vmem:[#allocation2 + $0x4] sm:$0xf] %v180
      %v183 = vld [vmem:[%s165] sm:$0xff]
      %185 = vrot.lane.b32.xlu0 %v183, 127
      %v186 = vpop.permute.xlu0 %185
      %v187 = vrot.slane %v186, 4
      %vm188 = vcmask 1039360
      %v189 = vsel %vm188, %v186, %v187
      %191 = vst [vmem:[#allocation2 + $0x8] sm:$0xf] %v189
      %v192 = vld [vmem:[%s165 + $0x4] sm:$0xff]
      %194 = vrot.lane.b32.xlu0 %v192, 94
      %v195 = vpop.permute.xlu0 %194
      %v196 = vrot.slane %v195, 4
      %vm197 = vcmask 769024
      %v198 = vsel %vm197, %v195, %v196
      %200 = vst [vmem:[#allocation2 + $0xc] sm:$0xf] %v198
      %v201 = vld [vmem:[%s165 + $0x4] sm:$0xff]
      %203 = vrot.lane.b32.xlu0 %v201, 13
      %v204 = vpop.permute.xlu0 %203
      %v205 = vrot.slane %v204, 4
      %vm206 = vcmask 105472
      %v207 = vsel %vm206, %v204, %v205
      %209 = vst [vmem:[#allocation2 + $0x10] sm:$0xf] %v207
      %v210 = vld [vmem:[%s165 + $0x4] sm:$0xff]
      %212 = vrot.lane.b32.xlu0 %v210, 93
      %v213 = vpop.permute.xlu0 %212
      %v214 = vrot.slane %v213, 4
      %vm215 = vcmask 760832
      %v216 = vsel %vm215, %v213, %v214
      %218 = vst [vmem:[#allocation2 + $0x14] sm:$0xf] %v216
      %v219 = vld [vmem:[%s165] sm:$0xff]
      %221 = vrot.lane.b32.xlu0 %v219, 119
      %v222 = vpop.permute.xlu0 %221
      %v223 = vrot.slane %v222, 4
      %vm224 = vcmask 973824
      %v225 = vsel %vm224, %v222, %v223
      %227 = vst [vmem:[#allocation2 + $0x18] sm:$0xf] %v225
      %v228 = vld [vmem:[%s165] sm:$0xff]
      %230 = vrot.lane.b32.xlu0 %v228, 38
      %v231 = vpop.permute.xlu0 %230
      %v232 = vrot.slane %v231, 4
      %vm233 = vcmask 310272
      %v234 = vsel %vm233, %v231, %v232
      %236 = vst [vmem:[#allocation2 + $0x1c] sm:$0xf] %v234
      %v237 = vld [vmem:[%s165] sm:$0xff]
      %239 = vrot.lane.b32.xlu0 %v237, 118
      %v240 = vpop.permute.xlu0 %239
      %v241 = vrot.slane %v240, 4
      %vm242 = vcmask 965632
      %v243 = vsel %vm242, %v240, %v241
      %245 = vst [vmem:[#allocation2 + $0x20] sm:$0xf] %v243
      %v246 = vld [vmem:[%s1] sm:$0xf]
      %v247 = vld [vmem:[%s1 + $0x4] sm:$0xf]
      %v248 = vld [vmem:[#allocation2] sm:$0xf]
      %v249 = vld [vmem:[#allocation2 + $0x4] sm:$0xf]
      %v250 = vld [vmem:[#allocation2 + $0x8] sm:$0xf]
      %v251 = vld [vmem:[#allocation2 + $0xc] sm:$0xf]
      %v252 = vld [vmem:[#allocation2 + $0x10] sm:$0xf]
      %v253 = vld [vmem:[#allocation2 + $0x14] sm:$0xf]
      %v254 = vld [vmem:[#allocation2 + $0x18] sm:$0xf]
      %v255 = vld [vmem:[#allocation2 + $0x1c] sm:$0xf]
      %v256 = vld [vmem:[#allocation2 + $0x20] sm:$0xf]
      %v257 = vld [vmem:[%s2] sm:$0xff]
      %v258 = vld [vmem:[%s2 + $0x8] sm:$0xff]
      %260 = vset.pattern.permute.xlu0 0
      %261 = vperm.xlu0 %260, %v257
      %v262 = vpop.permute.xlu0 %261
      %265 = vset.pattern.permute.xlu0 0
      %266 = vperm.xlu0 %265, %v258
      %v267 = vpop.permute.xlu0 %266
      %v271 = vunpack.c.l.b16 %v246
      %v272 = vunpack.c.l.b16 %v247
      %v273 = vpack.c.b16 %v272, %v271
      %v283 = vunpack.c.l.b16 %v248
      %v284 = vunpack.c.l.b16 %v249
      %v285 = vunpack.c.l.b16 %v250
      %v286 = vunpack.c.l.b16 %v251
      %v287 = vunpack.c.l.b16 %v252
      %v288 = vunpack.c.l.b16 %v253
      %v289 = vunpack.c.l.b16 %v254
      %v290 = vunpack.c.l.b16 %v255
      %v291 = vunpack.c.l.b16 %v256
      %v292 = vpack.c.b16 %v284, %v283
      %v293 = vpack.c.b16 %v286, %v285
      %v294 = vpack.c.b16 %v288, %v287
      %v295 = vpack.c.b16 %v290, %v289
      %v296 = vpack.c.b16 %v291, %v291
      %vm301 = vcmask 588800
      %v303 = vsel %vm301, %v273, 0
      %vm305 = vcmask 1043456
      %v307 = vsel %vm305, %v296, 0
      %309 = vmatpush.bf16.msra.mxu0 0
      %310 = vmatpush.bf16.msra.mxu0 0
      %311 = vmatpush.bf16.msra.mxu0 0
      %312 = vmatpush.bf16.msra.mxu0 %v307
      %313 = vmatpush.bf16.msra.mxu0 %v295
      %314 = vmatpush.bf16.msra.mxu0 %v294
      %315 = vmatpush.bf16.msra.mxu0 %v293
      %316 = vmatpush.bf16.msra.mxu0 %v292
      %317 = vmatmul.bf16.gmra.mxu0 %v303
      %v318 = vpop.f32.mrf.mxu0
      %v319 = vadd.f32 %v262, %v318
      %v320 = vpop.f32.mrf.mxu0
      %v321 = vadd.f32 %v267, %v320
      %322 = vdwg.mxu0
      %vm323 = vcmp.ge.f32.partialorder %v319, 0.0
      %vm324 = vcmp.ge.f32.partialorder %v321, 0.0
      %v325 = vmul.f32 %v319, 0.2
      %v326 = vmul.f32 %v321, 0.2
      %v327 = vsel %vm323, %v319, %v325
      %v328 = vsel %vm324, %v321, %v326
      %v329 = vpack.c.bf16 %v327, %v327
      %v330 = vpack.c.bf16 %v328, %v328
      %331 = vst [vmem:[%s170] sm:$0xf] %v329
      %332 = vst [vmem:[%s170 + $0x4] sm:$0xf] %v330
      %p333 = scmp.lt.s32.totalorder %s14, 1
      %s334 = scalar_select %p333, %s14, 1
      %s335 = smul.addr %s334, 2
      %s336 = smul.addr %s335, 4
      %s337 = scalar_lea.vmem %s3, %s336
      // Predicated region
      $region33: #{a_call__.3} parent=31 // pred_check
        %p338 = pneg %p100
      $region34: #{a_call__.3} parent=31 // pred_check_branch
        %340 = sbr.rel (%p338) target = $region36
      $region35: #{a_call__.3} parent=31 // pred_region
        _
      $region36: #{a_call__.3} parent=31 // pred_fallthru
        _
    $region32: #{a_call__.3} parent=5 // pred_fallthru
      _
    %p341 = scmp.le.s32.totalorder 2, %s9
    // Predicated region
    $region37: #{a_call__.3} parent=5 // pred_check
      %p342 = pneg %p341
    $region38: #{a_call__.3} parent=5 // pred_check_branch
      %344 = sbr.rel (%p342) target = $region40
    $region39: #{a_call__.3} parent=5 // pred_region
      %s345 = ssub.s32 %s9, 2
      // Predicated region
      $region41: #{a_call__.3} parent=39 // pred_check
        %p346 = pneg %p106
      $region42: #{a_call__.3} parent=39 // pred_check_branch
        %348 = sbr.rel (%p346) target = $region44
      $region43: #{a_call__.3} parent=39 // pred_region
        %p349 = scmp.lt.s32.totalorder %s15, 1
        %s350 = scalar_select %p349, %s15, 1
        %s351 = smul.addr %s350, 2
        %s352 = smul.addr %s351, 4
        %s353 = scalar_lea.vmem %s3, %s352
      $region44: #{a_call__.3} parent=39 // pred_fallthru
        _
    $region40: #{a_call__.3} parent=5 // pred_fallthru
      _
  $region6: #{a_call__.3} parent=0 // loop_footer
    %s13 = sadd.s32 1, %s9
  $region7: #{a_call__.3} parent=0 // loop_footer_branch
    %8 = sbr.rel target = $region3
  $region8: #{a_call__.3} parent=0 // loop_exit
    _

// kernel: a_call__.4
$region0: #{a_call__.4}
  #allocation0 [shape = 'u32[]', space=smem, size = 0x4, offset = 0x4, fixed_abs, tag = 'smem constant byte address 0x4 - core index']
  #allocation1 [shape = 'u32[72,128]{1,0:T(1,128)}', space=vmem, size = 0x9000, scoped, tag = 'internal scratch']
  #allocation2 [shape = 'bf16[16,128]{1,0:T(8,128)(2,1)}', space=vmem, size = 0x1000, scoped, tag = 'scratch operand']
  %s0 = inlined_call_operand.vmem [shape: bf16[2,16,128], index: 0, kind: input, shape index: {}]
  %s1 = inlined_call_operand.vmem [shape: bf16[32,16], index: 1, kind: input, shape index: {}]
  %s2 = inlined_call_operand.vmem [shape: f32[32,1], index: 2, kind: input, shape index: {}]
  %s3 = inlined_call_operand.vmem [shape: bf16[2,32,128], index: 3, kind: output, shape index: {}]
  %s4 = sld [smem:[#allocation0]]
  $region45: #{a_call__.4} parent=0
    _
  %s6 = ssub.s32 1, %s4
  %s7 = scalar_select 0, %s6, %s4
  loop: start=0, step=1, limit=4
  $region2: #{a_call__.4} parent=0 // loop_pre_header
    _
  $region3: #{a_call__.4} parent=0 // loop_header
    %s9 = sphi 0, %s13
    %p10 = scmp.ge.s32.totalorder %s9, 4
    %s19 = sphi 0, %s21
    %s22 = sphi 0, %s19
    %s23 = sphi 0, %s22
    %s39 = sphi 0, %s23
    %s43 = sphi 0, %s43
    %s45 = sphi 0, %s43
    %s46 = sphi 0, %s45
    %s60 = sphi 0, %s46
    %s64 = sphi 0, %s64
    %s66 = sphi 0, %s64
    %s67 = sphi 0, %s66
    %s81 = sphi 0, %s67
    %s87 = sphi 0, %s89
    %s90 = sphi 0, %s87
    %s91 = sphi 0, %s90
    %s107 = sphi 0, %s91
  $region4: #{a_call__.4} parent=0 // loop_header_branch
    %12 = sbr.rel (%p10) target = $region8
  $region5: #{a_call__.4} parent=0 // loop_body
    %s14 = ssub.s32 %s9, 1
    %s15 = ssub.s32 %s9, 2
    %s16 = sadd.s32 %s9, 1
    %s17 = ssub.s32 %s9, %s16
    %p18 = scmp.eq.s32.totalorder %s17, 0
    %s20 = sadd.s32 %s19, 1
    %s21 = scalar_select %p18, %s19, %s20
    %p24 = pneg %p18
    %p25 = scmp.eq.s32.totalorder %s9, 1
    %p26 = por %p24, %p25
    %p27 = scmp.ne.s32.totalorder %s19, %s22
    %p28 = scmp.eq.s32.totalorder %s9, 0
    %p29 = por %p27, %p28
    %p30 = scmp.ne.s32.totalorder %s19, %s22
    %p31 = scmp.eq.s32.totalorder %s14, 1
    %p32 = por %p30, %p31
    %p33 = scmp.ne.s32.totalorder %s22, %s23
    %p34 = scmp.eq.s32.totalorder %s14, 0
    %p35 = por %p33, %p34
    %p36 = scmp.ne.s32.totalorder %s22, %s23
    %p37 = scmp.eq.s32.totalorder %s15, 1
    %p38 = por %p36, %p37
    %p40 = scmp.ne.s32.totalorder %s23, %s39
    %p41 = scmp.eq.s32.totalorder %s15, 0
    %p42 = por %p40, %p41
    %s44 = sadd.s32 %s43, 1
    %p47 = scmp.eq.s32.totalorder %s9, 1
    %p48 = scmp.ne.s32.totalorder %s43, %s45
    %p49 = scmp.eq.s32.totalorder %s9, 0
    %p50 = por %p48, %p49
    %p51 = scmp.ne.s32.totalorder %s43, %s45
    %p52 = scmp.eq.s32.totalorder %s14, 1
    %p53 = por %p51, %p52
    %p54 = scmp.ne.s32.totalorder %s45, %s46
    %p55 = scmp.eq.s32.totalorder %s14, 0
    %p56 = por %p54, %p55
    %p57 = scmp.ne.s32.totalorder %s45, %s46
    %p58 = scmp.eq.s32.totalorder %s15, 1
    %p59 = por %p57, %p58
    %p61 = scmp.ne.s32.totalorder %s46, %s60
    %p62 = scmp.eq.s32.totalorder %s15, 0
    %p63 = por %p61, %p62
    %s65 = sadd.s32 %s64, 1
    %p68 = scmp.eq.s32.totalorder %s9, 1
    %p69 = scmp.ne.s32.totalorder %s64, %s66
    %p70 = scmp.eq.s32.totalorder %s9, 0
    %p71 = por %p69, %p70
    %p72 = scmp.ne.s32.totalorder %s64, %s66
    %p73 = scmp.eq.s32.totalorder %s14, 1
    %p74 = por %p72, %p73
    %p75 = scmp.ne.s32.totalorder %s66, %s67
    %p76 = scmp.eq.s32.totalorder %s14, 0
    %p77 = por %p75, %p76
    %p78 = scmp.ne.s32.totalorder %s66, %s67
    %p79 = scmp.eq.s32.totalorder %s15, 1
    %p80 = por %p78, %p79
    %p82 = scmp.ne.s32.totalorder %s67, %s81
    %p83 = scmp.eq.s32.totalorder %s15, 0
    %p84 = por %p82, %p83
    %s85 = ssub.s32 %s9, %s16
    %p86 = scmp.eq.s32.totalorder %s85, 0
    %s88 = sadd.s32 %s87, 1
    %s89 = scalar_select %p86, %s87, %s88
    %p92 = pneg %p86
    %p93 = scmp.eq.s32.totalorder %s9, 1
    %p94 = por %p92, %p93
    %p95 = scmp.ne.s32.totalorder %s87, %s90
    %p96 = scmp.eq.s32.totalorder %s9, 0
    %p97 = por %p95, %p96
    %p98 = scmp.ne.s32.totalorder %s87, %s90
    %p99 = scmp.eq.s32.totalorder %s14, 1
    %p100 = por %p98, %p99
    %p101 = scmp.ne.s32.totalorder %s90, %s91
    %p102 = scmp.eq.s32.totalorder %s14, 0
    %p103 = por %p101, %p102
    %p104 = scmp.ne.s32.totalorder %s90, %s91
    %p105 = scmp.eq.s32.totalorder %s15, 1
    %p106 = por %p104, %p105
    %p108 = scmp.ne.s32.totalorder %s91, %s107
    %p109 = scmp.eq.s32.totalorder %s15, 0
    %p110 = por %p108, %p109
    %p111 = scmp.le.s32.totalorder 1, %s9
    %p112 = scmp.lt.s32.totalorder %s9, 3
    %p113 = pnand %p111, %p112
    %p114 = pneg %p113
    // Predicated region
    $region9: #{a_call__.4} parent=5 // pred_check
      _
    $region10: #{a_call__.4} parent=5 // pred_check_branch
      %116 = sbr.rel (%p113) target = $region12
    $region11: #{a_call__.4} parent=5 // pred_region
      %s117 = ssub.s32 %s9, 1
      // Predicated region
      $region13: #{a_call__.4} parent=11 // pred_check
        %p118 = pneg %p56
      $region14: #{a_call__.4} parent=11 // pred_check_branch
        %120 = sbr.rel (%p118) target = $region16
      $region15: #{a_call__.4} parent=11 // pred_region
        _
      $region16: #{a_call__.4} parent=11 // pred_fallthru
        _
      // Predicated region
      $region17: #{a_call__.4} parent=11 // pred_check
        %p121 = pneg %p77
      $region18: #{a_call__.4} parent=11 // pred_check_branch
        %123 = sbr.rel (%p121) target = $region20
      $region19: #{a_call__.4} parent=11 // pred_region
        _
      $region20: #{a_call__.4} parent=11 // pred_fallthru
        _
    $region12: #{a_call__.4} parent=5 // pred_fallthru
      _
    %p124 = scmp.lt.s32.totalorder %s9, 2
    // Predicated region
    $region21: #{a_call__.4} parent=5 // pred_check
      %p125 = pneg %p124
    $region22: #{a_call__.4} parent=5 // pred_check_branch
      %127 = sbr.rel (%p125) target = $region24
    $region23: #{a_call__.4} parent=5 // pred_region
      // Predicated region
      $region25: #{a_call__.4} parent=23 // pred_check
        %p128 = pneg %p29
      $region26: #{a_call__.4} parent=23 // pred_check_branch
        %130 = sbr.rel (%p128) target = $region28
      $region27: #{a_call__.4} parent=23 // pred_region
        %p131 = scmp.lt.s32.totalorder %s9, 1
        %s132 = scalar_select %p131, %s9, 1
        %s133 = smul.addr %s132, 2
        %s134 = smul.addr %s133, 4
        %s135 = scalar_lea.vmem %s0, %s134
      $region28: #{a_call__.4} parent=23 // pred_fallthru
        _
    $region24: #{a_call__.4} parent=5 // pred_fallthru
      _
    %p136 = scmp.le.s32.totalorder 1, %s9
    %p137 = scmp.lt.s32.totalorder %s9, 3
    %p138 = pnand %p136, %p137
    %p139 = pneg %p138
    // Predicated region
    $region29: #{a_call__.4} parent=5 // pred_check
      _
    $region30: #{a_call__.4} parent=5 // pred_check_branch
      %141 = sbr.rel (%p138) target = $region32
    $region31: #{a_call__.4} parent=5 // pred_region
      %s142 = ssub.s32 %s9, 1
      %p143 = scmp.lt.s32.totalorder %s14, 1
      %s144 = scalar_select %p143, %s14, 1
      %s145 = smul.addr %s144, 2
      %s146 = smul.addr %s145, 4
      %s147 = scalar_lea.vmem %s0, %s146
      %p148 = pneg %p35
      %p149 = pneg %p32
      %p150 = pneg %p56
      %p151 = pneg %p53
      %p152 = pneg %p77
      %p153 = pneg %p74
      %p154 = pneg %p103
      %p155 = pneg %p100
      %p156 = scmp.lt.s32.totalorder %s14, 1
      %s157 = scalar_select %p156, %s14, 1
      %s158 = smul.addr %s157, 4
      %s159 = smul.addr %s158, 4
      %s160 = scalar_lea.vmem %s3, %s159
      %p161 = scmp.lt.s32.totalorder %s14, 1
      %s162 = scalar_select %p161, %s14, 1
      %s163 = smul.addr %s162, 2
      %s164 = smul.addr %s163, 4
      %s165 = scalar_lea.vmem %s0, %s164
      %p166 = scmp.lt.s32.totalorder %s14, 1
      %s167 = scalar_select %p166, %s14, 1
      %s168 = smul.addr %s167, 4
      %s169 = smul.addr %s168, 4
      %s170 = scalar_lea.vmem %s3, %s169
      %v172 = vld [vmem:[%s165] sm:$0xf]
      %v173 = vld [vmem:[%s165 + $0x4] sm:$0xf]
      %174 = vst [vmem:[#allocation2] sm:$0xf] %v172
      %175 = vst [vmem:[#allocation2 + $0x4] sm:$0xf] %v173
      %v176 = vld [vmem:[%s1] sm:$0xf]
      %v177 = vld [vmem:[%s1 + $0x4] sm:$0xf]
      %v178 = vld [vmem:[%s1 + $0x8] sm:$0xf]
      %v179 = vld [vmem:[%s1 + $0xc] sm:$0xf]
      %v180 = vld [vmem:[#allocation2] sm:$0xf]
      %v181 = vld [vmem:[#allocation2 + $0x4] sm:$0xf]
      %v182 = vld [vmem:[%s2] sm:$0xff]
      %v183 = vld [vmem:[%s2 + $0x8] sm:$0xff]
      %v184 = vld [vmem:[%s2 + $0x10] sm:$0xff]
      %v185 = vld [vmem:[%s2 + $0x18] sm:$0xff]
      %187 = vset.pattern.permute.xlu0 0
      %188 = vperm.xlu0 %187, %v182
      %v189 = vpop.permute.xlu0 %188
      %192 = vset.pattern.permute.xlu0 0
      %193 = vperm.xlu0 %192, %v183
      %v194 = vpop.permute.xlu0 %193
      %197 = vset.pattern.permute.xlu0 0
      %198 = vperm.xlu0 %197, %v184
      %v199 = vpop.permute.xlu0 %198
      %202 = vset.pattern.permute.xlu0 0
      %203 = vperm.xlu0 %202, %v185
      %v204 = vpop.permute.xlu0 %203
      %v210 = vunpack.c.l.b16 %v176
      %v211 = vunpack.c.l.b16 %v177
      %v212 = vunpack.c.l.b16 %v178
      %v213 = vunpack.c.l.b16 %v179
      %v214 = vpack.c.b16 %v211, %v210
      %v215 = vpack.c.b16 %v213, %v212
      %v218 = vunpack.c.l.b16 %v180
      %v219 = vunpack.c.l.b16 %v181
      %v220 = vpack.c.b16 %v219, %v218
      %vm222 = vcmask 130048
      %v224 = vsel %vm222, %v214, 0
      %v227 = vsel %vm222, %v215, 0
      %229 = vmatpush.bf16.msra.mxu0 0
      %230 = vmatpush.bf16.msra.mxu0 0
      %231 = vmatpush.bf16.msra.mxu0 0
      %232 = vmatpush.bf16.msra.mxu0 0
      %233 = vmatpush.bf16.msra.mxu0 0
      %234 = vmatpush.bf16.msra.mxu0 0
      %235 = vmatpush.bf16.msra.mxu0 0
      %236 = vmatpush.bf16.msra.mxu0 %v220
      %237 = vmatmul.bf16.gmra.mxu0 %v224
      %v238 = vpop.f32.mrf.mxu0
      %v239 = vadd.f32 %v189, %v238
      %v240 = vpop.f32.mrf.mxu0
      %v241 = vadd.f32 %v194, %v240
      %242 = vmatmul.bf16.gmra.mxu0 %v227
      %v243 = vpop.f32.mrf.mxu0
      %v244 = vadd.f32 %v199, %v243
      %v245 = vpop.f32.mrf.mxu0
      %v246 = vadd.f32 %v204, %v245
      %247 = vdwg.mxu0
      %v248 = vpack.c.bf16 %v239, %v239
      %v249 = vpack.c.bf16 %v241, %v241
      %v250 = vpack.c.bf16 %v244, %v244
      %v251 = vpack.c.bf16 %v246, %v246
      %252 = vst [vmem:[%s170] sm:$0xf] %v248
      %253 = vst [vmem:[%s170 + $0x4] sm:$0xf] %v249
      %254 = vst [vmem:[%s170 + $0x8] sm:$0xf] %v250
      %255 = vst [vmem:[%s170 + $0xc] sm:$0xf] %v251
      %p256 = scmp.lt.s32.totalorder %s14, 1
      %s257 = scalar_select %p256, %s14, 1
      %s258 = smul.addr %s257, 4
      %s259 = smul.addr %s258, 4
      %s260 = scalar_lea.vmem %s3, %s259
      // Predicated region
      $region33: #{a_call__.4} parent=31 // pred_check
        %p261 = pneg %p100
      $region34: #{a_call__.4} parent=31 // pred_check_branch
        %263 = sbr.rel (%p261) target = $region36
      $region35: #{a_call__.4} parent=31 // pred_region
        _
      $region36: #{a_call__.4} parent=31 // pred_fallthru
        _
    $region32: #{a_call__.4} parent=5 // pred_fallthru
      _
    %p264 = scmp.le.s32.totalorder 2, %s9
    // Predicated region
    $region37: #{a_call__.4} parent=5 // pred_check
      %p265 = pneg %p264
    $region38: #{a_call__.4} parent=5 // pred_check_branch
      %267 = sbr.rel (%p265) target = $region40
    $region39: #{a_call__.4} parent=5 // pred_region
      %s268 = ssub.s32 %s9, 2
      // Predicated region
      $region41: #{a_call__.4} parent=39 // pred_check
        %p269 = pneg %p106
      $region42: #{a_call__.4} parent=39 // pred_check_branch
        %271 = sbr.rel (%p269) target = $region44
      $region43: #{a_call__.4} parent=39 // pred_region
        %p272 = scmp.lt.s32.totalorder %s15, 1
        %s273 = scalar_select %p272, %s15, 1
        %s274 = smul.addr %s273, 4
        %s275 = smul.addr %s274, 4
        %s276 = scalar_lea.vmem %s3, %s275
      $region44: #{a_call__.4} parent=39 // pred_fallthru
        _
    $region40: #{a_call__.4} parent=5 // pred_fallthru
      _
  $region6: #{a_call__.4} parent=0 // loop_footer
    %s13 = sadd.s32 1, %s9
  $region7: #{a_call__.4} parent=0 // loop_footer_branch
    %8 = sbr.rel target = $region3
  $region8: #{a_call__.4} parent=0 // loop_exit
    _

// kernel: a_call__.5
$region0: #{a_call__.5}
  #allocation0 [shape = 'u32[]', space=smem, size = 0x4, offset = 0x4, fixed_abs, tag = 'smem constant byte address 0x4 - core index']
  #allocation1 [shape = 'u32[72,128]{1,0:T(1,128)}', space=vmem, size = 0x9000, scoped, tag = 'internal scratch']
  #allocation2 [shape = 'bf16[128,128]{1,0:T(8,128)(2,1)}', space=vmem, size = 0x8000, scoped, tag = 'scratch operand']
  %s0 = inlined_call_operand.vmem [shape: bf16[2,32,138], index: 0, kind: input, shape index: {}]
  %s1 = inlined_call_operand.vmem [shape: bf16[32,128], index: 1, kind: input, shape index: {}]
  %s2 = inlined_call_operand.vmem [shape: f32[32,1], index: 2, kind: input, shape index: {}]
  %s3 = inlined_call_operand.vmem [shape: f32[2,32,128], index: 3, kind: output, shape index: {}]
  %s4 = sld [smem:[#allocation0]]
  $region45: #{a_call__.5} parent=0
    _
  %s6 = ssub.s32 1, %s4
  %s7 = scalar_select 0, %s6, %s4
  loop: start=0, step=1, limit=4
  $region2: #{a_call__.5} parent=0 // loop_pre_header
    _
  $region3: #{a_call__.5} parent=0 // loop_header
    %s9 = sphi 0, %s13
    %p10 = scmp.ge.s32.totalorder %s9, 4
    %s19 = sphi 0, %s21
    %s22 = sphi 0, %s19
    %s23 = sphi 0, %s22
    %s39 = sphi 0, %s23
    %s43 = sphi 0, %s43
    %s45 = sphi 0, %s43
    %s46 = sphi 0, %s45
    %s60 = sphi 0, %s46
    %s64 = sphi 0, %s64
    %s66 = sphi 0, %s64
    %s67 = sphi 0, %s66
    %s81 = sphi 0, %s67
    %s87 = sphi 0, %s89
    %s90 = sphi 0, %s87
    %s91 = sphi 0, %s90
    %s107 = sphi 0, %s91
  $region4: #{a_call__.5} parent=0 // loop_header_branch
    %12 = sbr.rel (%p10) target = $region8
  $region5: #{a_call__.5} parent=0 // loop_body
    %s14 = ssub.s32 %s9, 1
    %s15 = ssub.s32 %s9, 2
    %s16 = sadd.s32 %s9, 1
    %s17 = ssub.s32 %s9, %s16
    %p18 = scmp.eq.s32.totalorder %s17, 0
    %s20 = sadd.s32 %s19, 1
    %s21 = scalar_select %p18, %s19, %s20
    %p24 = pneg %p18
    %p25 = scmp.eq.s32.totalorder %s9, 1
    %p26 = por %p24, %p25
    %p27 = scmp.ne.s32.totalorder %s19, %s22
    %p28 = scmp.eq.s32.totalorder %s9, 0
    %p29 = por %p27, %p28
    %p30 = scmp.ne.s32.totalorder %s19, %s22
    %p31 = scmp.eq.s32.totalorder %s14, 1
    %p32 = por %p30, %p31
    %p33 = scmp.ne.s32.totalorder %s22, %s23
    %p34 = scmp.eq.s32.totalorder %s14, 0
    %p35 = por %p33, %p34
    %p36 = scmp.ne.s32.totalorder %s22, %s23
    %p37 = scmp.eq.s32.totalorder %s15, 1
    %p38 = por %p36, %p37
    %p40 = scmp.ne.s32.totalorder %s23, %s39
    %p41 = scmp.eq.s32.totalorder %s15, 0
    %p42 = por %p40, %p41
    %s44 = sadd.s32 %s43, 1
    %p47 = scmp.eq.s32.totalorder %s9, 1
    %p48 = scmp.ne.s32.totalorder %s43, %s45
    %p49 = scmp.eq.s32.totalorder %s9, 0
    %p50 = por %p48, %p49
    %p51 = scmp.ne.s32.totalorder %s43, %s45
    %p52 = scmp.eq.s32.totalorder %s14, 1
    %p53 = por %p51, %p52
    %p54 = scmp.ne.s32.totalorder %s45, %s46
    %p55 = scmp.eq.s32.totalorder %s14, 0
    %p56 = por %p54, %p55
    %p57 = scmp.ne.s32.totalorder %s45, %s46
    %p58 = scmp.eq.s32.totalorder %s15, 1
    %p59 = por %p57, %p58
    %p61 = scmp.ne.s32.totalorder %s46, %s60
    %p62 = scmp.eq.s32.totalorder %s15, 0
    %p63 = por %p61, %p62
    %s65 = sadd.s32 %s64, 1
    %p68 = scmp.eq.s32.totalorder %s9, 1
    %p69 = scmp.ne.s32.totalorder %s64, %s66
    %p70 = scmp.eq.s32.totalorder %s9, 0
    %p71 = por %p69, %p70
    %p72 = scmp.ne.s32.totalorder %s64, %s66
    %p73 = scmp.eq.s32.totalorder %s14, 1
    %p74 = por %p72, %p73
    %p75 = scmp.ne.s32.totalorder %s66, %s67
    %p76 = scmp.eq.s32.totalorder %s14, 0
    %p77 = por %p75, %p76
    %p78 = scmp.ne.s32.totalorder %s66, %s67
    %p79 = scmp.eq.s32.totalorder %s15, 1
    %p80 = por %p78, %p79
    %p82 = scmp.ne.s32.totalorder %s67, %s81
    %p83 = scmp.eq.s32.totalorder %s15, 0
    %p84 = por %p82, %p83
    %s85 = ssub.s32 %s9, %s16
    %p86 = scmp.eq.s32.totalorder %s85, 0
    %s88 = sadd.s32 %s87, 1
    %s89 = scalar_select %p86, %s87, %s88
    %p92 = pneg %p86
    %p93 = scmp.eq.s32.totalorder %s9, 1
    %p94 = por %p92, %p93
    %p95 = scmp.ne.s32.totalorder %s87, %s90
    %p96 = scmp.eq.s32.totalorder %s9, 0
    %p97 = por %p95, %p96
    %p98 = scmp.ne.s32.totalorder %s87, %s90
    %p99 = scmp.eq.s32.totalorder %s14, 1
    %p100 = por %p98, %p99
    %p101 = scmp.ne.s32.totalorder %s90, %s91
    %p102 = scmp.eq.s32.totalorder %s14, 0
    %p103 = por %p101, %p102
    %p104 = scmp.ne.s32.totalorder %s90, %s91
    %p105 = scmp.eq.s32.totalorder %s15, 1
    %p106 = por %p104, %p105
    %p108 = scmp.ne.s32.totalorder %s91, %s107
    %p109 = scmp.eq.s32.totalorder %s15, 0
    %p110 = por %p108, %p109
    %p111 = scmp.le.s32.totalorder 1, %s9
    %p112 = scmp.lt.s32.totalorder %s9, 3
    %p113 = pnand %p111, %p112
    %p114 = pneg %p113
    // Predicated region
    $region9: #{a_call__.5} parent=5 // pred_check
      _
    $region10: #{a_call__.5} parent=5 // pred_check_branch
      %116 = sbr.rel (%p113) target = $region12
    $region11: #{a_call__.5} parent=5 // pred_region
      %s117 = ssub.s32 %s9, 1
      // Predicated region
      $region13: #{a_call__.5} parent=11 // pred_check
        %p118 = pneg %p56
      $region14: #{a_call__.5} parent=11 // pred_check_branch
        %120 = sbr.rel (%p118) target = $region16
      $region15: #{a_call__.5} parent=11 // pred_region
        _
      $region16: #{a_call__.5} parent=11 // pred_fallthru
        _
      // Predicated region
      $region17: #{a_call__.5} parent=11 // pred_check
        %p121 = pneg %p77
      $region18: #{a_call__.5} parent=11 // pred_check_branch
        %123 = sbr.rel (%p121) target = $region20
      $region19: #{a_call__.5} parent=11 // pred_region
        _
      $region20: #{a_call__.5} parent=11 // pred_fallthru
        _
    $region12: #{a_call__.5} parent=5 // pred_fallthru
      _
    %p124 = scmp.lt.s32.totalorder %s9, 2
    // Predicated region
    $region21: #{a_call__.5} parent=5 // pred_check
      %p125 = pneg %p124
    $region22: #{a_call__.5} parent=5 // pred_check_branch
      %127 = sbr.rel (%p125) target = $region24
    $region23: #{a_call__.5} parent=5 // pred_region
      // Predicated region
      $region25: #{a_call__.5} parent=23 // pred_check
        %p128 = pneg %p29
      $region26: #{a_call__.5} parent=23 // pred_check_branch
        %130 = sbr.rel (%p128) target = $region28
      $region27: #{a_call__.5} parent=23 // pred_region
        %p131 = scmp.lt.s32.totalorder %s9, 1
        %s132 = scalar_select %p131, %s9, 1
        %s133 = smul.addr %s132, 8
        %s134 = smul.addr %s133, 4
        %s135 = scalar_lea.vmem %s0, %s134
      $region28: #{a_call__.5} parent=23 // pred_fallthru
        _
    $region24: #{a_call__.5} parent=5 // pred_fallthru
      _
    %p136 = scmp.le.s32.totalorder 1, %s9
    %p137 = scmp.lt.s32.totalorder %s9, 3
    %p138 = pnand %p136, %p137
    %p139 = pneg %p138
    // Predicated region
    $region29: #{a_call__.5} parent=5 // pred_check
      _
    $region30: #{a_call__.5} parent=5 // pred_check_branch
      %141 = sbr.rel (%p138) target = $region32
    $region31: #{a_call__.5} parent=5 // pred_region
      %s142 = ssub.s32 %s9, 1
      %p143 = scmp.lt.s32.totalorder %s14, 1
      %s144 = scalar_select %p143, %s14, 1
      %s145 = smul.addr %s144, 8
      %s146 = smul.addr %s145, 4
      %s147 = scalar_lea.vmem %s0, %s146
      %p148 = pneg %p35
      %p149 = pneg %p32
      %p150 = pneg %p56
      %p151 = pneg %p53
      %p152 = pneg %p77
      %p153 = pneg %p74
      %p154 = pneg %p103
      %p155 = pneg %p100
      %p156 = scmp.lt.s32.totalorder %s14, 1
      %s157 = scalar_select %p156, %s14, 1
      %s158 = smul.addr %s157, 4
      %s159 = smul.addr %s158, 8
      %s160 = scalar_lea.vmem %s3, %s159
      %p161 = scmp.lt.s32.totalorder %s14, 1
      %s162 = scalar_select %p161, %s14, 1
      %s163 = smul.addr %s162, 8
      %s164 = smul.addr %s163, 4
      %s165 = scalar_lea.vmem %s0, %s164
      %p166 = scmp.lt.s32.totalorder %s14, 1
      %s167 = scalar_select %p166, %s14, 1
      %s168 = smul.addr %s167, 4
      %s169 = smul.addr %s168, 8
      %s170 = scalar_lea.vmem %s3, %s169
      %v171 = vld [vmem:[%s165] sm:$0xf]
      %v172 = vld [vmem:[%s165 + $0x8] sm:$0xf]
      %v173 = vld [vmem:[%s165 + $0x10] sm:$0xf]
      %v174 = vld [vmem:[%s165 + $0x18] sm:$0xf]
      %175 = vst [vmem:[#allocation2] sm:$0xf] %v171
      %176 = vst [vmem:[#allocation2 + $0x4] sm:$0xf] %v172
      %177 = vst [vmem:[#allocation2 + $0x8] sm:$0xf] %v173
      %178 = vst [vmem:[#allocation2 + $0xc] sm:$0xf] %v174
      %v179 = vld [vmem:[%s165] sm:$0xff]
      %v180 = vld [vmem:[%s165 + $0x8] sm:$0xff]
      %v181 = vld [vmem:[%s165 + $0x10] sm:$0xff]
      %v182 = vld [vmem:[%s165 + $0x18] sm:$0xff]
      %187 = vrot.lane.b32.xlu0 %v179, 127
      %v188 = vpop.permute.xlu0 %187
      %189 = vrot.lane.b32.xlu0 %v180, 127
      %v190 = vpop.permute.xlu0 %189
      %191 = vrot.lane.b32.xlu0 %v181, 127
      %v192 = vpop.permute.xlu0 %191
      %193 = vrot.lane.b32.xlu0 %v182, 127
      %v194 = vpop.permute.xlu0 %193
      %v195 = vrot.slane %v188, 4
      %v196 = vrot.slane %v190, 4
      %v197 = vrot.slane %v192, 4
      %v198 = vrot.slane %v194, 4
      %vm199 = vcmask 1039360
      %v200 = vsel %vm199, %v188, %v195
      %v201 = vsel %vm199, %v190, %v196
      %v202 = vsel %vm199, %v192, %v197
      %v203 = vsel %vm199, %v194, %v198
      %208 = vst [vmem:[#allocation2 + $0x10] sm:$0xf] %v200
      %209 = vst [vmem:[#allocation2 + $0x14] sm:$0xf] %v201
      %210 = vst [vmem:[#allocation2 + $0x18] sm:$0xf] %v202
      %211 = vst [vmem:[#allocation2 + $0x1c] sm:$0xf] %v203
      %v212 = vld [vmem:[%s165] sm:$0xff]
      %v213 = vld [vmem:[%s165 + $0x8] sm:$0xff]
      %v214 = vld [vmem:[%s165 + $0x10] sm:$0xff]
      %v215 = vld [vmem:[%s165 + $0x18] sm:$0xff]
      %220 = vrot.lane.b32.xlu0 %v212, 119
      %v221 = vpop.permute.xlu0 %220
      %222 = vrot.lane.b32.xlu0 %v213, 119
      %v223 = vpop.permute.xlu0 %222
      %224 = vrot.lane.b32.xlu0 %v214, 119
      %v225 = vpop.permute.xlu0 %224
      %226 = vrot.lane.b32.xlu0 %v215, 119
      %v227 = vpop.permute.xlu0 %226
      %v228 = vrot.slane %v221, 4
      %v229 = vrot.slane %v223, 4
      %v230 = vrot.slane %v225, 4
      %v231 = vrot.slane %v227, 4
      %vm232 = vcmask 973824
      %v233 = vsel %vm232, %v221, %v228
      %v234 = vsel %vm232, %v223, %v229
      %v235 = vsel %vm232, %v225, %v230
      %v236 = vsel %vm232, %v227, %v231
      %241 = vst [vmem:[#allocation2 + $0x20] sm:$0xf] %v233
      %242 = vst [vmem:[#allocation2 + $0x24] sm:$0xf] %v234
      %243 = vst [vmem:[#allocation2 + $0x28] sm:$0xf] %v235
      %244 = vst [vmem:[#allocation2 + $0x2c] sm:$0xf] %v236
      %v245 = vld [vmem:[%s165] sm:$0xff]
      %v246 = vld [vmem:[%s165 + $0x8] sm:$0xff]
      %v247 = vld [vmem:[%s165 + $0x10] sm:$0xff]
      %v248 = vld [vmem:[%s165 + $0x18] sm:$0xff]
      %253 = vrot.lane.b32.xlu0 %v245, 118
      %v254 = vpop.permute.xlu0 %253
      %255 = vrot.lane.b32.xlu0 %v246, 118
      %v256 = vpop.permute.xlu0 %255
      %257 = vrot.lane.b32.xlu0 %v247, 118
      %v258 = vpop.permute.xlu0 %257
      %259 = vrot.lane.b32.xlu0 %v248, 118
      %v260 = vpop.permute.xlu0 %259
      %v261 = vrot.slane %v254, 4
      %v262 = vrot.slane %v256, 4
      %v263 = vrot.slane %v258, 4
      %v264 = vrot.slane %v260, 4
      %vm265 = vcmask 965632
      %v266 = vsel %vm265, %v254, %v261
      %v267 = vsel %vm265, %v256, %v262
      %v268 = vsel %vm265, %v258, %v263
      %v269 = vsel %vm265, %v260, %v264
      %274 = vst [vmem:[#allocation2 + $0x30] sm:$0xf] %v266
      %275 = vst [vmem:[#allocation2 + $0x34] sm:$0xf] %v267
      %276 = vst [vmem:[#allocation2 + $0x38] sm:$0xf] %v268
      %277 = vst [vmem:[#allocation2 + $0x3c] sm:$0xf] %v269
      %v278 = vld [vmem:[%s1] sm:$0xf]
      %v279 = vld [vmem:[%s1 + $0x4] sm:$0xf]
      %v280 = vld [vmem:[%s1 + $0x8] sm:$0xf]
      %v281 = vld [vmem:[%s1 + $0xc] sm:$0xf]
      %v282 = vld [vmem:[#allocation2] sm:$0xf]
      %v283 = vld [vmem:[#allocation2 + $0x4] sm:$0xf]
      %v284 = vld [vmem:[#allocation2 + $0x8] sm:$0xf]
      %v285 = vld [vmem:[#allocation2 + $0xc] sm:$0xf]
      %v286 = vld [vmem:[#allocation2 + $0x10] sm:$0xf]
      %v287 = vld [vmem:[#allocation2 + $0x14] sm:$0xf]
      %v288 = vld [vmem:[#allocation2 + $0x18] sm:$0xf]
      %v289 = vld [vmem:[#allocation2 + $0x1c] sm:$0xf]
      %v290 = vld [vmem:[#allocation2 + $0x20] sm:$0xf]
      %v291 = vld [vmem:[#allocation2 + $0x24] sm:$0xf]
      %v292 = vld [vmem:[#allocation2 + $0x28] sm:$0xf]
      %v293 = vld [vmem:[#allocation2 + $0x2c] sm:$0xf]
      %v294 = vld [vmem:[#allocation2 + $0x30] sm:$0xf]
      %v295 = vld [vmem:[#allocation2 + $0x34] sm:$0xf]
      %v296 = vld [vmem:[#allocation2 + $0x38] sm:$0xf]
      %v297 = vld [vmem:[#allocation2 + $0x3c] sm:$0xf]
      %v298 = vld [vmem:[%s2] sm:$0xff]
      %v299 = vld [vmem:[%s2 + $0x8] sm:$0xff]
      %v300 = vld [vmem:[%s2 + $0x10] sm:$0xff]
      %v301 = vld [vmem:[%s2 + $0x18] sm:$0xff]
      %303 = vset.pattern.permute.xlu0 0
      %304 = vperm.xlu0 %303, %v298
      %v305 = vpop.permute.xlu0 %304
      %308 = vset.pattern.permute.xlu0 0
      %309 = vperm.xlu0 %308, %v299
      %v310 = vpop.permute.xlu0 %309
      %313 = vset.pattern.permute.xlu0 0
      %314 = vperm.xlu0 %313, %v300
      %v315 = vpop.permute.xlu0 %314
      %318 = vset.pattern.permute.xlu0 0
      %319 = vperm.xlu0 %318, %v301
      %v320 = vpop.permute.xlu0 %319
      %v326 = vunpack.c.l.b16 %v278
      %v327 = vunpack.c.l.b16 %v279
      %v328 = vunpack.c.l.b16 %v280
      %v329 = vunpack.c.l.b16 %v281
      %v330 = vpack.c.b16 %v327, %v326
      %v331 = vpack.c.b16 %v329, %v328
      %v350 = vunpack.c.l.b16 %v282
      %v351 = vunpack.c.l.b16 %v283
      %v352 = vunpack.c.l.b16 %v284
      %v353 = vunpack.c.l.b16 %v285
      %v354 = vunpack.c.l.b16 %v286
      %v355 = vunpack.c.l.b16 %v287
      %v356 = vunpack.c.l.b16 %v288
      %v357 = vunpack.c.l.b16 %v289
      %v358 = vunpack.c.l.b16 %v290
      %v359 = vunpack.c.l.b16 %v291
      %v360 = vunpack.c.l.b16 %v292
      %v361 = vunpack.c.l.b16 %v293
      %v362 = vunpack.c.l.b16 %v294
      %v363 = vunpack.c.l.b16 %v295
      %v364 = vunpack.c.l.b16 %v296
      %v365 = vunpack.c.l.b16 %v297
      %v366 = vpack.c.b16 %v351, %v350
      %v367 = vpack.c.b16 %v353, %v352
      %v368 = vpack.c.b16 %v355, %v354
      %v369 = vpack.c.b16 %v357, %v356
      %v370 = vpack.c.b16 %v359, %v358
      %v371 = vpack.c.b16 %v361, %v360
      %v372 = vpack.c.b16 %v363, %v362
      %v373 = vpack.c.b16 %v365, %v364
      %382 = vmatpush.bf16.msra.mxu0 %v373
      %383 = vmatpush.bf16.msra.mxu0 %v372
      %384 = vmatpush.bf16.msra.mxu0 %v371
      %385 = vmatpush.bf16.msra.mxu0 %v370
      %386 = vmatpush.bf16.msra.mxu0 %v369
      %387 = vmatpush.bf16.msra.mxu0 %v368
      %388 = vmatpush.bf16.msra.mxu0 %v367
      %389 = vmatpush.bf16.msra.mxu0 %v366
      %390 = vmatmul.bf16.gmra.mxu0 %v330
      %v391 = vpop.f32.mrf.mxu0
      %v392 = vadd.f32 %v305, %v391
      %v393 = vpop.f32.mrf.mxu0
      %v394 = vadd.f32 %v310, %v393
      %395 = vmatmul.bf16.gmra.mxu0 %v331
      %v396 = vpop.f32.mrf.mxu0
      %v397 = vadd.f32 %v315, %v396
      %v398 = vpop.f32.mrf.mxu0
      %v399 = vadd.f32 %v320, %v398
      %400 = vdwg.mxu0
      %v401 = vmax.f32 %v392, 0.0
      %v402 = vmax.f32 %v394, 0.0
      %v403 = vmax.f32 %v397, 0.0
      %v404 = vmax.f32 %v399, 0.0
      %405 = vst [vmem:[%s170] sm:$0xff] %v401
      %406 = vst [vmem:[%s170 + $0x8] sm:$0xff] %v402
      %407 = vst [vmem:[%s170 + $0x10] sm:$0xff] %v403
      %408 = vst [vmem:[%s170 + $0x18] sm:$0xff] %v404
      %p409 = scmp.lt.s32.totalorder %s14, 1
      %s410 = scalar_select %p409, %s14, 1
      %s411 = smul.addr %s410, 4
      %s412 = smul.addr %s411, 8
      %s413 = scalar_lea.vmem %s3, %s412
      // Predicated region
      $region33: #{a_call__.5} parent=31 // pred_check
        %p414 = pneg %p100
      $region34: #{a_call__.5} parent=31 // pred_check_branch
        %416 = sbr.rel (%p414) target = $region36
      $region35: #{a_call__.5} parent=31 // pred_region
        _
      $region36: #{a_call__.5} parent=31 // pred_fallthru
        _
    $region32: #{a_call__.5} parent=5 // pred_fallthru
      _
    %p417 = scmp.le.s32.totalorder 2, %s9
    // Predicated region
    $region37: #{a_call__.5} parent=5 // pred_check
      %p418 = pneg %p417
    $region38: #{a_call__.5} parent=5 // pred_check_branch
      %420 = sbr.rel (%p418) target = $region40
    $region39: #{a_call__.5} parent=5 // pred_region
      %s421 = ssub.s32 %s9, 2
      // Predicated region
      $region41: #{a_call__.5} parent=39 // pred_check
        %p422 = pneg %p106
      $region42: #{a_call__.5} parent=39 // pred_check_branch
        %424 = sbr.rel (%p422) target = $region44
      $region43: #{a_call__.5} parent=39 // pred_region
        %p425 = scmp.lt.s32.totalorder %s15, 1
        %s426 = scalar_select %p425, %s15, 1
        %s427 = smul.addr %s426, 4
        %s428 = smul.addr %s427, 8
        %s429 = scalar_lea.vmem %s3, %s428
      $region44: #{a_call__.5} parent=39 // pred_fallthru
        _
    $region40: #{a_call__.5} parent=5 // pred_fallthru
      _
  $region6: #{a_call__.5} parent=0 // loop_footer
    %s13 = sadd.s32 1, %s9
  $region7: #{a_call__.5} parent=0 // loop_footer_branch
    %8 = sbr.rel target = $region3
  $region8: #{a_call__.5} parent=0 // loop_exit
    _

</llo_original>
